<compile_context>
chip_gen: v6e
topology: v6e:2x2x1
jax: 0.10.0
libtpu: 0.0.40
codegen_flags: <defaults>
</compile_context>

<pallas_src>
import functools
import math

import jax
import jax.numpy as jnp
from jax.experimental import pallas as pl
from jax.experimental.pallas import tpu as pltpu


def _full_spec(shape):
    # Whole-array block; every operand here is tiny and lives entirely in VMEM.
    return pl.BlockSpec(shape, lambda: (0,) * len(shape))


def _round_up(x, m):
    return -(-x // m) * m


def _wavenet_kernel(x_ref, wg_ref, bg_ref, wrm_ref, br_ref, bmix_ref, out_ref,
                    *, dilations, num_channels, ksize, slab_n, halo):
    """Fused WaveNet forward: all gated-residual layers + linear_mix.

    Activations are a single (C, N) register slab, N = B * L_pad lanes, each
    batch segment right-aligned (PyTorch's "last L samples" trims become
    position-wise).  A dilated tap with shift s is the slab shifted right by
    s lanes; it is built from xw = concat([x_cur[:, N-H:], x_cur], axis=1)
    (tile-aligned lane concat, H multiple of 128) by taking the value slice
    xw[:, H-s : H-s+N].  Lanes p < s receive wrap-around data and lanes near
    a segment start read across segments, but both only affect positions that
    precede that layer's valid region, and the wrapper keeps only the last
    L_final lanes of every segment.
    """
    C, K, N, H = num_channels, ksize, slab_n, halo
    f32 = jnp.float32

    # Layer-0 input is a single channel broadcast across all C rows: the
    # layer-0 gate weights are zero-padded on input channels >= 1 (conv result
    # unchanged) and the residual add then reproduces PyTorch's channel
    # broadcast of the 1-channel block input.
    x_cur = jnp.broadcast_to(x_ref[...], (C, N)).astype(f32)
    mix = jnp.zeros((1, N), f32)

    for l, d in enumerate(dilations):
        # Wrap-extended slab (C, H + N); lanes [0, H) are the slab tail and
        # are only ever read by garbage (later-trimmed) output lanes.
        xw = jnp.concatenate([x_cur[:, N - H:], x_cur], axis=1)

        # All K dilated taps stacked along the sublane/channel axis -> one
        # (2C, K*C) @ (K*C, N) MXU matmul per layer (sigmoid || tanh packed
        # along the output-channel axis).
        wins = []
        for k in range(K):
            shift = d * (K - 1 - k)
            wins.append(x_cur if shift == 0 else xw[:, H - shift:H - shift + N])
        rhs = jnp.concatenate(wins, axis=0)                        # (K*C, N)
        pre = jnp.dot(wg_ref[l], rhs, preferred_element_type=f32) + bg_ref[l]
        gated = jnp.tanh(pre[C:2 * C]) * jax.nn.sigmoid(pre[0:C])  # (C, N)

        # 1x1 residual conv and this layer's linear_mix row share one matmul:
        # rows [0, C) of wrm are the residual weight, row C is the w_mix row,
        # rows (C, 2C) are zero padding.  Skip tensors never materialize; the
        # mix accumulator stays (1, N).
        rm = jnp.dot(wrm_ref[l], gated, preferred_element_type=f32)  # (2C, N)
        mix = mix + rm[C:C + 1]
        x_cur = rm[0:C] + br_ref[l] + x_cur                          # residual add

    out_ref[...] = (mix + bmix_ref[...]).astype(out_ref.dtype)


def wavenet_forward(x, params):
    """Pallas forward for WaveNet.  x: (B, 1, T) -> (B, 1, L_final)."""
    B, c0, T = x.shape
    assert c0 == 1, "WaveNet input must have a single channel"
    layers = params["layers"]
    n_layers = len(layers)
    dilations = tuple(int(lp["dilation"]) for lp in layers)
    K, C, _ = layers[0]["ws"].shape
    assert C % 8 == 0, "num_channels must be a multiple of 8 (f32 sublane tile)"
    total_shift = sum(d * (K - 1) for d in dilations)
    L_final = T - total_shift
    assert L_final > 0, "input too short for the receptive field"

    # Flatten batch into the lane axis.  Per-batch segment length `seg` makes
    # N = B * seg a multiple of 128 (lane-dense vregs / unmasked stores); the
    # T valid samples sit at the END of each segment (right-aligned, matching
    # PyTorch's trim-from-the-end).
    step = 128 // math.gcd(B, 128)
    seg = _round_up(T, step)
    N = B * seg
    x_slab = jnp.pad(x[:, 0, :].astype(jnp.float32),
                     ((0, 0), (seg - T, 0))).reshape(1, N)

    # Wrap-halo width for the in-register dilated shifts; a multiple of 128 so
    # the per-layer lane concat stays tile-aligned.  max_shift < T <= N, so
    # halo <= N always holds.
    max_shift = max(d * (K - 1) for d in dilations)
    halo = _round_up(max_shift, 128)

    # ---- pack all per-layer parameters into a handful of stacked slabs ----
    wmix = params["w_mix"].astype(jnp.float32).reshape(n_layers, C)
    wg_l, bg_l, wrm_l, br_l = [], [], [], []
    for l, lp in enumerate(layers):
        ws, wt = lp["ws"].astype(jnp.float32), lp["wt"].astype(jnp.float32)
        c_in = ws.shape[2]
        w = jnp.concatenate([ws, wt], axis=1)                      # (K, 2C, c_in)
        if c_in < C:                                               # layer 0: pad 1 -> C
            w = jnp.pad(w, ((0, 0), (0, 0), (0, C - c_in)))
        # Column order k*C + c, matching the stacked shifted-window RHS.
        wg_l.append(jnp.transpose(w, (1, 0, 2)).reshape(2 * C, K * C))
        bg_l.append(jnp.concatenate([lp["bs"], lp["bt"]], axis=0).astype(jnp.float32))
        wrm_l.append(jnp.concatenate(
            [lp["wr"].astype(jnp.float32), wmix[l][None, :],
             jnp.zeros((C - 1, C), jnp.float32)], axis=0))         # (2C, C)
        br_l.append(lp["br"].astype(jnp.float32))
    args = [x_slab,
            jnp.stack(wg_l),                                       # (L, 2C, K*C)
            jnp.stack(bg_l),                                       # (L, 2C, 1)
            jnp.stack(wrm_l),                                      # (L, 2C, C)
            jnp.stack(br_l),                                       # (L, C, 1)
            params["b_mix"].astype(jnp.float32)]                   # (1, 1)

    kernel = functools.partial(_wavenet_kernel, dilations=dilations,
                               num_channels=C, ksize=K, slab_n=N, halo=halo)
    # TODO(synk): for production-scale T, tile the lane axis with a grid
    # (each tile carrying a halo of sum(d*(K-1)) extra input lanes,
    # dimension_semantics=("parallel",)) so the fused kernel shards across
    # v7x's two TensorCores and stays within its 64 MiB VMEM; at these toy
    # sizes a single fused invocation is latency-bound and fits with huge
    # headroom.
    # TODO(synk): cast MXU operands to bf16 on v6e/v7x once num_channels is
    # large enough for MXU time to matter (would require looser tolerances
    # versus the f32 reference).
    out = pl.pallas_call(
        kernel,
        out_shape=jax.ShapeDtypeStruct((1, N), jnp.float32),
        in_specs=[_full_spec(a.shape) for a in args],
        out_specs=_full_spec((1, N)),
        compiler_params=pltpu.CompilerParams(vmem_limit_bytes=32 * 1024 * 1024),
    )(*args)

    # Un-flatten and keep the last L_final samples of every batch segment.
    return out.reshape(B, seg)[:, seg - L_final:][:, None, :]


# ---------------------------------------------------------------------------
# Deterministic parameter init (shapes match nn.Conv1d; values synthetic).
# ---------------------------------------------------------------------------
def init_params(key, num_channels, dilation_depth, num_repeat, kernel_size=2,
                dtype=jnp.float32):
    dilations = [2 ** d for d in range(dilation_depth)] * num_repeat
    layers = []
    for i, d in enumerate(dilations):
        c_in = 1 if i == 0 else num_channels
        key, *ks = jax.random.split(key, 7)
        sk = (1.0 / (c_in * kernel_size)) ** 0.5
        sr = (1.0 / num_channels) ** 0.5
        layers.append(dict(
            dilation=d,
            ws=jax.random.uniform(ks[0], (kernel_size, num_channels, c_in), dtype, -sk, sk),
            bs=jax.random.uniform(ks[1], (num_channels, 1), dtype, -sk, sk),
            wt=jax.random.uniform(ks[2], (kernel_size, num_channels, c_in), dtype, -sk, sk),
            bt=jax.random.uniform(ks[3], (num_channels, 1), dtype, -sk, sk),
            wr=jax.random.uniform(ks[4], (num_channels, num_channels), dtype, -sr, sr),
            br=jax.random.uniform(ks[5], (num_channels, 1), dtype, -sr, sr),
        ))
    ct = num_channels * dilation_depth * num_repeat
    key, k1, k2 = jax.random.split(key, 3)
    sm = (1.0 / ct) ** 0.5
    return dict(
        layers=layers,
        w_mix=jax.random.uniform(k1, (ct, 1), dtype, -sm, sm),
        b_mix=jax.random.uniform(k2, (1, 1), dtype, -sm, sm),
    )


# ---------------------------------------------------------------------------
# Pure-JAX reference (same math, no Pallas) for a correctness check.
# ---------------------------------------------------------------------------
def wavenet_reference(x, params):
    out = x
    skips = []
    for lp in params["layers"]:
        xin = out
        d = int(lp["dilation"])
        K = lp["ws"].shape[0]
        L_out = xin.shape[2] - d * (K - 1)

        def conv(w, bvec):
            acc = bvec[None, :, :]
            for k in range(K):
                xk = xin[:, :, k * d:k * d + L_out]
                acc = acc + jnp.einsum("oc,bcl->bol", w[k], xk)
            return acc

        s = conv(lp["ws"], lp["bs"])
        t = conv(lp["wt"], lp["bt"])
        gated = jnp.tanh(t) * jax.nn.sigmoid(s)
        skips.append(gated)
        res = jnp.einsum("oc,bcl->bol", lp["wr"], gated) + lp["br"][None]
        out = res + xin[:, :, xin.shape[2] - L_out:]
    L = out.shape[2]
    cat = jnp.concatenate([sk[:, :, sk.shape[2] - L:] for sk in skips], axis=1)
    return jnp.einsum("co,bcl->bol", params["w_mix"], cat) + params["b_mix"][None]


if __name__ == "__main__":
    # small, shape-consistent config: x is (batch, 1, time) like the PyTorch model
    num_channels, dilation_depth, num_repeat, kernel_size = 8, 3, 2, 2
    B, T = 2, 64

    key = jax.random.PRNGKey(0)
    kp, kx = jax.random.split(key)
    params = init_params(kp, num_channels, dilation_depth, num_repeat, kernel_size)
    x = jax.random.normal(kx, (B, 1, T), jnp.float32)

    y = wavenet_forward(x, params)
    y = jax.block_until_ready(y)

    dilations = [2 ** d for d in range(dilation_depth)] * num_repeat
    expected_L = T - sum(d * (kernel_size - 1) for d in dilations)
    assert y.shape == (B, 1, expected_L), y.shape

    y_ref = wavenet_reference(x, params)
    assert jnp.allclose(y, y_ref, rtol=1e-4, atol=1e-4), \
        float(jnp.max(jnp.abs(y - y_ref)))

    print("KERNEL_OK")
</pallas_src>

<mosaic_0001>
module attributes {stable_mosaic.version = 11 : i64} {
  func.func @_wavenet_kernel(%arg0: memref<1x128xf32, #tpu.memory_space<vmem>>, %arg1: memref<6x16x16xf32, #tpu.memory_space<vmem>>, %arg2: memref<6x16x1xf32, #tpu.memory_space<vmem>>, %arg3: memref<6x16x8xf32, #tpu.memory_space<vmem>>, %arg4: memref<6x8x1xf32, #tpu.memory_space<vmem>>, %arg5: memref<1x1xf32, #tpu.memory_space<vmem>>, %arg6: memref<1x128xf32, #tpu.memory_space<vmem>>) attributes {dimension_semantics = [], scalar_prefetch = 0 : i64, scratch_operands = 0 : i64, tpu.core_type = #tpu.core_type<tc>} {
    %c0 = arith.constant 0 : index
    %c0_0 = arith.constant 0 : index
    %0 = vector.load %arg0[%c0, %c0_0] : memref<1x128xf32, #tpu.memory_space<vmem>>, vector<1x128xf32>
    %1 = vector.shape_cast %0 : vector<1x128xf32> to vector<1x128xf32>
    %2 = vector.broadcast %1 : vector<1x128xf32> to vector<8x128xf32>
    %cst = arith.constant 0.000000e+00 : f32
    %3 = vector.broadcast %cst : f32 to vector<1x128xf32>
    %4 = tpu.concatenate %2, %2 in 1 : vector<8x128xf32>, vector<8x128xf32> -> vector<8x256xf32>
    %5 = vector.extract_strided_slice %4 {offsets = [0, 127], sizes = [8, 128], strides = [1, 1]} : vector<8x256xf32> to vector<8x128xf32>
    %6 = tpu.concatenate %5, %2 in 0 : vector<8x128xf32>, vector<8x128xf32> -> vector<16x128xf32>
    %c0_1 = arith.constant 0 : index
    %c0_2 = arith.constant 0 : index
    %c0_3 = arith.constant 0 : index
    %7 = vector.load %arg1[%c0_1, %c0_2, %c0_3] : memref<6x16x16xf32, #tpu.memory_space<vmem>>, vector<1x16x16xf32>
    %8 = vector.shape_cast %7 : vector<1x16x16xf32> to vector<16x16xf32>
    %cst_4 = arith.constant dense<0.000000e+00> : vector<16x128xf32>
    %9 = tpu.matmul %8, %6, %cst_4 {dimension_numbers = #tpu.dot_dimension_numbers<[1], [0], [0], [1], [0, 0, 1, 1], [], []>} : vector<16x16xf32>, vector<16x128xf32>, vector<16x128xf32> -> vector<16x128xf32>
    %c0_5 = arith.constant 0 : index
    %c0_6 = arith.constant 0 : index
    %c0_7 = arith.constant 0 : index
    %10 = vector.load %arg2[%c0_5, %c0_6, %c0_7] : memref<6x16x1xf32, #tpu.memory_space<vmem>>, vector<1x16x1xf32>
    %11 = vector.shape_cast %10 : vector<1x16x1xf32> to vector<16x1xf32>
    %12 = vector.broadcast %11 : vector<16x1xf32> to vector<16x128xf32>
    %13 = arith.addf %9, %12 : vector<16x128xf32>
    %14 = vector.extract_strided_slice %13 {offsets = [8, 0], sizes = [8, 128], strides = [1, 1]} : vector<16x128xf32> to vector<8x128xf32>
    %15 = math.tanh %14 : vector<8x128xf32>
    %16 = vector.extract_strided_slice %13 {offsets = [0, 0], sizes = [8, 128], strides = [1, 1]} : vector<16x128xf32> to vector<8x128xf32>
    %17 = arith.negf %16 : vector<8x128xf32>
    %18 = math.exp %17 : vector<8x128xf32>
    %cst_8 = arith.constant 1.000000e+00 : f32
    %19 = vector.broadcast %cst_8 : f32 to vector<8x128xf32>
    %20 = arith.addf %19, %18 : vector<8x128xf32>
    %21 = arith.divf %19, %20 : vector<8x128xf32>
    %22 = arith.mulf %15, %21 : vector<8x128xf32>
    %c0_9 = arith.constant 0 : index
    %c0_10 = arith.constant 0 : index
    %c0_11 = arith.constant 0 : index
    %23 = vector.load %arg3[%c0_9, %c0_10, %c0_11] : memref<6x16x8xf32, #tpu.memory_space<vmem>>, vector<1x16x8xf32>
    %24 = vector.shape_cast %23 : vector<1x16x8xf32> to vector<16x8xf32>
    %cst_12 = arith.constant dense<0.000000e+00> : vector<16x128xf32>
    %25 = tpu.matmul %24, %22, %cst_12 {dimension_numbers = #tpu.dot_dimension_numbers<[1], [0], [0], [1], [0, 0, 1, 1], [], []>} : vector<16x8xf32>, vector<8x128xf32>, vector<16x128xf32> -> vector<16x128xf32>
    %26 = vector.extract_strided_slice %25 {offsets = [8, 0], sizes = [1, 128], strides = [1, 1]} : vector<16x128xf32> to vector<1x128xf32>
    %27 = arith.addf %3, %26 : vector<1x128xf32>
    %28 = vector.extract_strided_slice %25 {offsets = [0, 0], sizes = [8, 128], strides = [1, 1]} : vector<16x128xf32> to vector<8x128xf32>
    %c0_13 = arith.constant 0 : index
    %c0_14 = arith.constant 0 : index
    %c0_15 = arith.constant 0 : index
    %29 = vector.load %arg4[%c0_13, %c0_14, %c0_15] : memref<6x8x1xf32, #tpu.memory_space<vmem>>, vector<1x8x1xf32>
    %30 = vector.shape_cast %29 : vector<1x8x1xf32> to vector<8x1xf32>
    %31 = vector.broadcast %30 : vector<8x1xf32> to vector<8x128xf32>
    %32 = arith.addf %28, %31 : vector<8x128xf32>
    %33 = arith.addf %32, %2 : vector<8x128xf32>
    %34 = tpu.concatenate %33, %33 in 1 : vector<8x128xf32>, vector<8x128xf32> -> vector<8x256xf32>
    %35 = vector.extract_strided_slice %34 {offsets = [0, 126], sizes = [8, 128], strides = [1, 1]} : vector<8x256xf32> to vector<8x128xf32>
    %36 = tpu.concatenate %35, %33 in 0 : vector<8x128xf32>, vector<8x128xf32> -> vector<16x128xf32>
    %c1 = arith.constant 1 : index
    %c0_16 = arith.constant 0 : index
    %c0_17 = arith.constant 0 : index
    %37 = vector.load %arg1[%c1, %c0_16, %c0_17] : memref<6x16x16xf32, #tpu.memory_space<vmem>>, vector<1x16x16xf32>
    %38 = vector.shape_cast %37 : vector<1x16x16xf32> to vector<16x16xf32>
    %cst_18 = arith.constant dense<0.000000e+00> : vector<16x128xf32>
    %39 = tpu.matmul %38, %36, %cst_18 {dimension_numbers = #tpu.dot_dimension_numbers<[1], [0], [0], [1], [0, 0, 1, 1], [], []>} : vector<16x16xf32>, vector<16x128xf32>, vector<16x128xf32> -> vector<16x128xf32>
    %c1_19 = arith.constant 1 : index
    %c0_20 = arith.constant 0 : index
    %c0_21 = arith.constant 0 : index
    %40 = vector.load %arg2[%c1_19, %c0_20, %c0_21] : memref<6x16x1xf32, #tpu.memory_space<vmem>>, vector<1x16x1xf32>
    %41 = vector.shape_cast %40 : vector<1x16x1xf32> to vector<16x1xf32>
    %42 = vector.broadcast %41 : vector<16x1xf32> to vector<16x128xf32>
    %43 = arith.addf %39, %42 : vector<16x128xf32>
    %44 = vector.extract_strided_slice %43 {offsets = [8, 0], sizes = [8, 128], strides = [1, 1]} : vector<16x128xf32> to vector<8x128xf32>
    %45 = math.tanh %44 : vector<8x128xf32>
    %46 = vector.extract_strided_slice %43 {offsets = [0, 0], sizes = [8, 128], strides = [1, 1]} : vector<16x128xf32> to vector<8x128xf32>
    %47 = arith.negf %46 : vector<8x128xf32>
    %48 = math.exp %47 : vector<8x128xf32>
    %cst_22 = arith.constant 1.000000e+00 : f32
    %49 = vector.broadcast %cst_22 : f32 to vector<8x128xf32>
    %50 = arith.addf %49, %48 : vector<8x128xf32>
    %51 = arith.divf %49, %50 : vector<8x128xf32>
    %52 = arith.mulf %45, %51 : vector<8x128xf32>
    %c1_23 = arith.constant 1 : index
    %c0_24 = arith.constant 0 : index
    %c0_25 = arith.constant 0 : index
    %53 = vector.load %arg3[%c1_23, %c0_24, %c0_25] : memref<6x16x8xf32, #tpu.memory_space<vmem>>, vector<1x16x8xf32>
    %54 = vector.shape_cast %53 : vector<1x16x8xf32> to vector<16x8xf32>
    %cst_26 = arith.constant dense<0.000000e+00> : vector<16x128xf32>
    %55 = tpu.matmul %54, %52, %cst_26 {dimension_numbers = #tpu.dot_dimension_numbers<[1], [0], [0], [1], [0, 0, 1, 1], [], []>} : vector<16x8xf32>, vector<8x128xf32>, vector<16x128xf32> -> vector<16x128xf32>
    %56 = vector.extract_strided_slice %55 {offsets = [8, 0], sizes = [1, 128], strides = [1, 1]} : vector<16x128xf32> to vector<1x128xf32>
    %57 = arith.addf %27, %56 : vector<1x128xf32>
    %58 = vector.extract_strided_slice %55 {offsets = [0, 0], sizes = [8, 128], strides = [1, 1]} : vector<16x128xf32> to vector<8x128xf32>
    %c1_27 = arith.constant 1 : index
    %c0_28 = arith.constant 0 : index
    %c0_29 = arith.constant 0 : index
    %59 = vector.load %arg4[%c1_27, %c0_28, %c0_29] : memref<6x8x1xf32, #tpu.memory_space<vmem>>, vector<1x8x1xf32>
    %60 = vector.shape_cast %59 : vector<1x8x1xf32> to vector<8x1xf32>
    %61 = vector.broadcast %60 : vector<8x1xf32> to vector<8x128xf32>
    %62 = arith.addf %58, %61 : vector<8x128xf32>
    %63 = arith.addf %62, %33 : vector<8x128xf32>
    %64 = tpu.concatenate %63, %63 in 1 : vector<8x128xf32>, vector<8x128xf32> -> vector<8x256xf32>
    %65 = vector.extract_strided_slice %64 {offsets = [0, 124], sizes = [8, 128], strides = [1, 1]} : vector<8x256xf32> to vector<8x128xf32>
    %66 = tpu.concatenate %65, %63 in 0 : vector<8x128xf32>, vector<8x128xf32> -> vector<16x128xf32>
    %c2 = arith.constant 2 : index
    %c0_30 = arith.constant 0 : index
    %c0_31 = arith.constant 0 : index
    %67 = vector.load %arg1[%c2, %c0_30, %c0_31] : memref<6x16x16xf32, #tpu.memory_space<vmem>>, vector<1x16x16xf32>
    %68 = vector.shape_cast %67 : vector<1x16x16xf32> to vector<16x16xf32>
    %cst_32 = arith.constant dense<0.000000e+00> : vector<16x128xf32>
    %69 = tpu.matmul %68, %66, %cst_32 {dimension_numbers = #tpu.dot_dimension_numbers<[1], [0], [0], [1], [0, 0, 1, 1], [], []>} : vector<16x16xf32>, vector<16x128xf32>, vector<16x128xf32> -> vector<16x128xf32>
    %c2_33 = arith.constant 2 : index
    %c0_34 = arith.constant 0 : index
    %c0_35 = arith.constant 0 : index
    %70 = vector.load %arg2[%c2_33, %c0_34, %c0_35] : memref<6x16x1xf32, #tpu.memory_space<vmem>>, vector<1x16x1xf32>
    %71 = vector.shape_cast %70 : vector<1x16x1xf32> to vector<16x1xf32>
    %72 = vector.broadcast %71 : vector<16x1xf32> to vector<16x128xf32>
    %73 = arith.addf %69, %72 : vector<16x128xf32>
    %74 = vector.extract_strided_slice %73 {offsets = [8, 0], sizes = [8, 128], strides = [1, 1]} : vector<16x128xf32> to vector<8x128xf32>
    %75 = math.tanh %74 : vector<8x128xf32>
    %76 = vector.extract_strided_slice %73 {offsets = [0, 0], sizes = [8, 128], strides = [1, 1]} : vector<16x128xf32> to vector<8x128xf32>
    %77 = arith.negf %76 : vector<8x128xf32>
    %78 = math.exp %77 : vector<8x128xf32>
    %cst_36 = arith.constant 1.000000e+00 : f32
    %79 = vector.broadcast %cst_36 : f32 to vector<8x128xf32>
    %80 = arith.addf %79, %78 : vector<8x128xf32>
    %81 = arith.divf %79, %80 : vector<8x128xf32>
    %82 = arith.mulf %75, %81 : vector<8x128xf32>
    %c2_37 = arith.constant 2 : index
    %c0_38 = arith.constant 0 : index
    %c0_39 = arith.constant 0 : index
    %83 = vector.load %arg3[%c2_37, %c0_38, %c0_39] : memref<6x16x8xf32, #tpu.memory_space<vmem>>, vector<1x16x8xf32>
    %84 = vector.shape_cast %83 : vector<1x16x8xf32> to vector<16x8xf32>
    %cst_40 = arith.constant dense<0.000000e+00> : vector<16x128xf32>
    %85 = tpu.matmul %84, %82, %cst_40 {dimension_numbers = #tpu.dot_dimension_numbers<[1], [0], [0], [1], [0, 0, 1, 1], [], []>} : vector<16x8xf32>, vector<8x128xf32>, vector<16x128xf32> -> vector<16x128xf32>
    %86 = vector.extract_strided_slice %85 {offsets = [8, 0], sizes = [1, 128], strides = [1, 1]} : vector<16x128xf32> to vector<1x128xf32>
    %87 = arith.addf %57, %86 : vector<1x128xf32>
    %88 = vector.extract_strided_slice %85 {offsets = [0, 0], sizes = [8, 128], strides = [1, 1]} : vector<16x128xf32> to vector<8x128xf32>
    %c2_41 = arith.constant 2 : index
    %c0_42 = arith.constant 0 : index
    %c0_43 = arith.constant 0 : index
    %89 = vector.load %arg4[%c2_41, %c0_42, %c0_43] : memref<6x8x1xf32, #tpu.memory_space<vmem>>, vector<1x8x1xf32>
    %90 = vector.shape_cast %89 : vector<1x8x1xf32> to vector<8x1xf32>
    %91 = vector.broadcast %90 : vector<8x1xf32> to vector<8x128xf32>
    %92 = arith.addf %88, %91 : vector<8x128xf32>
    %93 = arith.addf %92, %63 : vector<8x128xf32>
    %94 = tpu.concatenate %93, %93 in 1 : vector<8x128xf32>, vector<8x128xf32> -> vector<8x256xf32>
    %95 = vector.extract_strided_slice %94 {offsets = [0, 127], sizes = [8, 128], strides = [1, 1]} : vector<8x256xf32> to vector<8x128xf32>
    %96 = tpu.concatenate %95, %93 in 0 : vector<8x128xf32>, vector<8x128xf32> -> vector<16x128xf32>
    %c3 = arith.constant 3 : index
    %c0_44 = arith.constant 0 : index
    %c0_45 = arith.constant 0 : index
    %97 = vector.load %arg1[%c3, %c0_44, %c0_45] : memref<6x16x16xf32, #tpu.memory_space<vmem>>, vector<1x16x16xf32>
    %98 = vector.shape_cast %97 : vector<1x16x16xf32> to vector<16x16xf32>
    %cst_46 = arith.constant dense<0.000000e+00> : vector<16x128xf32>
    %99 = tpu.matmul %98, %96, %cst_46 {dimension_numbers = #tpu.dot_dimension_numbers<[1], [0], [0], [1], [0, 0, 1, 1], [], []>} : vector<16x16xf32>, vector<16x128xf32>, vector<16x128xf32> -> vector<16x128xf32>
    %c3_47 = arith.constant 3 : index
    %c0_48 = arith.constant 0 : index
    %c0_49 = arith.constant 0 : index
    %100 = vector.load %arg2[%c3_47, %c0_48, %c0_49] : memref<6x16x1xf32, #tpu.memory_space<vmem>>, vector<1x16x1xf32>
    %101 = vector.shape_cast %100 : vector<1x16x1xf32> to vector<16x1xf32>
    %102 = vector.broadcast %101 : vector<16x1xf32> to vector<16x128xf32>
    %103 = arith.addf %99, %102 : vector<16x128xf32>
    %104 = vector.extract_strided_slice %103 {offsets = [8, 0], sizes = [8, 128], strides = [1, 1]} : vector<16x128xf32> to vector<8x128xf32>
    %105 = math.tanh %104 : vector<8x128xf32>
    %106 = vector.extract_strided_slice %103 {offsets = [0, 0], sizes = [8, 128], strides = [1, 1]} : vector<16x128xf32> to vector<8x128xf32>
    %107 = arith.negf %106 : vector<8x128xf32>
    %108 = math.exp %107 : vector<8x128xf32>
    %cst_50 = arith.constant 1.000000e+00 : f32
    %109 = vector.broadcast %cst_50 : f32 to vector<8x128xf32>
    %110 = arith.addf %109, %108 : vector<8x128xf32>
    %111 = arith.divf %109, %110 : vector<8x128xf32>
    %112 = arith.mulf %105, %111 : vector<8x128xf32>
    %c3_51 = arith.constant 3 : index
    %c0_52 = arith.constant 0 : index
    %c0_53 = arith.constant 0 : index
    %113 = vector.load %arg3[%c3_51, %c0_52, %c0_53] : memref<6x16x8xf32, #tpu.memory_space<vmem>>, vector<1x16x8xf32>
    %114 = vector.shape_cast %113 : vector<1x16x8xf32> to vector<16x8xf32>
    %cst_54 = arith.constant dense<0.000000e+00> : vector<16x128xf32>
    %115 = tpu.matmul %114, %112, %cst_54 {dimension_numbers = #tpu.dot_dimension_numbers<[1], [0], [0], [1], [0, 0, 1, 1], [], []>} : vector<16x8xf32>, vector<8x128xf32>, vector<16x128xf32> -> vector<16x128xf32>
    %116 = vector.extract_strided_slice %115 {offsets = [8, 0], sizes = [1, 128], strides = [1, 1]} : vector<16x128xf32> to vector<1x128xf32>
    %117 = arith.addf %87, %116 : vector<1x128xf32>
    %118 = vector.extract_strided_slice %115 {offsets = [0, 0], sizes = [8, 128], strides = [1, 1]} : vector<16x128xf32> to vector<8x128xf32>
    %c3_55 = arith.constant 3 : index
    %c0_56 = arith.constant 0 : index
    %c0_57 = arith.constant 0 : index
    %119 = vector.load %arg4[%c3_55, %c0_56, %c0_57] : memref<6x8x1xf32, #tpu.memory_space<vmem>>, vector<1x8x1xf32>
    %120 = vector.shape_cast %119 : vector<1x8x1xf32> to vector<8x1xf32>
    %121 = vector.broadcast %120 : vector<8x1xf32> to vector<8x128xf32>
    %122 = arith.addf %118, %121 : vector<8x128xf32>
    %123 = arith.addf %122, %93 : vector<8x128xf32>
    %124 = tpu.concatenate %123, %123 in 1 : vector<8x128xf32>, vector<8x128xf32> -> vector<8x256xf32>
    %125 = vector.extract_strided_slice %124 {offsets = [0, 126], sizes = [8, 128], strides = [1, 1]} : vector<8x256xf32> to vector<8x128xf32>
    %126 = tpu.concatenate %125, %123 in 0 : vector<8x128xf32>, vector<8x128xf32> -> vector<16x128xf32>
    %c4 = arith.constant 4 : index
    %c0_58 = arith.constant 0 : index
    %c0_59 = arith.constant 0 : index
    %127 = vector.load %arg1[%c4, %c0_58, %c0_59] : memref<6x16x16xf32, #tpu.memory_space<vmem>>, vector<1x16x16xf32>
    %128 = vector.shape_cast %127 : vector<1x16x16xf32> to vector<16x16xf32>
    %cst_60 = arith.constant dense<0.000000e+00> : vector<16x128xf32>
    %129 = tpu.matmul %128, %126, %cst_60 {dimension_numbers = #tpu.dot_dimension_numbers<[1], [0], [0], [1], [0, 0, 1, 1], [], []>} : vector<16x16xf32>, vector<16x128xf32>, vector<16x128xf32> -> vector<16x128xf32>
    %c4_61 = arith.constant 4 : index
    %c0_62 = arith.constant 0 : index
    %c0_63 = arith.constant 0 : index
    %130 = vector.load %arg2[%c4_61, %c0_62, %c0_63] : memref<6x16x1xf32, #tpu.memory_space<vmem>>, vector<1x16x1xf32>
    %131 = vector.shape_cast %130 : vector<1x16x1xf32> to vector<16x1xf32>
    %132 = vector.broadcast %131 : vector<16x1xf32> to vector<16x128xf32>
    %133 = arith.addf %129, %132 : vector<16x128xf32>
    %134 = vector.extract_strided_slice %133 {offsets = [8, 0], sizes = [8, 128], strides = [1, 1]} : vector<16x128xf32> to vector<8x128xf32>
    %135 = math.tanh %134 : vector<8x128xf32>
    %136 = vector.extract_strided_slice %133 {offsets = [0, 0], sizes = [8, 128], strides = [1, 1]} : vector<16x128xf32> to vector<8x128xf32>
    %137 = arith.negf %136 : vector<8x128xf32>
    %138 = math.exp %137 : vector<8x128xf32>
    %cst_64 = arith.constant 1.000000e+00 : f32
    %139 = vector.broadcast %cst_64 : f32 to vector<8x128xf32>
    %140 = arith.addf %139, %138 : vector<8x128xf32>
    %141 = arith.divf %139, %140 : vector<8x128xf32>
    %142 = arith.mulf %135, %141 : vector<8x128xf32>
    %c4_65 = arith.constant 4 : index
    %c0_66 = arith.constant 0 : index
    %c0_67 = arith.constant 0 : index
    %143 = vector.load %arg3[%c4_65, %c0_66, %c0_67] : memref<6x16x8xf32, #tpu.memory_space<vmem>>, vector<1x16x8xf32>
    %144 = vector.shape_cast %143 : vector<1x16x8xf32> to vector<16x8xf32>
    %cst_68 = arith.constant dense<0.000000e+00> : vector<16x128xf32>
    %145 = tpu.matmul %144, %142, %cst_68 {dimension_numbers = #tpu.dot_dimension_numbers<[1], [0], [0], [1], [0, 0, 1, 1], [], []>} : vector<16x8xf32>, vector<8x128xf32>, vector<16x128xf32> -> vector<16x128xf32>
    %146 = vector.extract_strided_slice %145 {offsets = [8, 0], sizes = [1, 128], strides = [1, 1]} : vector<16x128xf32> to vector<1x128xf32>
    %147 = arith.addf %117, %146 : vector<1x128xf32>
    %148 = vector.extract_strided_slice %145 {offsets = [0, 0], sizes = [8, 128], strides = [1, 1]} : vector<16x128xf32> to vector<8x128xf32>
    %c4_69 = arith.constant 4 : index
    %c0_70 = arith.constant 0 : index
    %c0_71 = arith.constant 0 : index
    %149 = vector.load %arg4[%c4_69, %c0_70, %c0_71] : memref<6x8x1xf32, #tpu.memory_space<vmem>>, vector<1x8x1xf32>
    %150 = vector.shape_cast %149 : vector<1x8x1xf32> to vector<8x1xf32>
    %151 = vector.broadcast %150 : vector<8x1xf32> to vector<8x128xf32>
    %152 = arith.addf %148, %151 : vector<8x128xf32>
    %153 = arith.addf %152, %123 : vector<8x128xf32>
    %154 = tpu.concatenate %153, %153 in 1 : vector<8x128xf32>, vector<8x128xf32> -> vector<8x256xf32>
    %155 = vector.extract_strided_slice %154 {offsets = [0, 124], sizes = [8, 128], strides = [1, 1]} : vector<8x256xf32> to vector<8x128xf32>
    %156 = tpu.concatenate %155, %153 in 0 : vector<8x128xf32>, vector<8x128xf32> -> vector<16x128xf32>
    %c5 = arith.constant 5 : index
    %c0_72 = arith.constant 0 : index
    %c0_73 = arith.constant 0 : index
    %157 = vector.load %arg1[%c5, %c0_72, %c0_73] : memref<6x16x16xf32, #tpu.memory_space<vmem>>, vector<1x16x16xf32>
    %158 = vector.shape_cast %157 : vector<1x16x16xf32> to vector<16x16xf32>
    %cst_74 = arith.constant dense<0.000000e+00> : vector<16x128xf32>
    %159 = tpu.matmul %158, %156, %cst_74 {dimension_numbers = #tpu.dot_dimension_numbers<[1], [0], [0], [1], [0, 0, 1, 1], [], []>} : vector<16x16xf32>, vector<16x128xf32>, vector<16x128xf32> -> vector<16x128xf32>
    %c5_75 = arith.constant 5 : index
    %c0_76 = arith.constant 0 : index
    %c0_77 = arith.constant 0 : index
    %160 = vector.load %arg2[%c5_75, %c0_76, %c0_77] : memref<6x16x1xf32, #tpu.memory_space<vmem>>, vector<1x16x1xf32>
    %161 = vector.shape_cast %160 : vector<1x16x1xf32> to vector<16x1xf32>
    %162 = vector.broadcast %161 : vector<16x1xf32> to vector<16x128xf32>
    %163 = arith.addf %159, %162 : vector<16x128xf32>
    %164 = vector.extract_strided_slice %163 {offsets = [8, 0], sizes = [8, 128], strides = [1, 1]} : vector<16x128xf32> to vector<8x128xf32>
    %165 = math.tanh %164 : vector<8x128xf32>
    %166 = vector.extract_strided_slice %163 {offsets = [0, 0], sizes = [8, 128], strides = [1, 1]} : vector<16x128xf32> to vector<8x128xf32>
    %167 = arith.negf %166 : vector<8x128xf32>
    %168 = math.exp %167 : vector<8x128xf32>
    %cst_78 = arith.constant 1.000000e+00 : f32
    %169 = vector.broadcast %cst_78 : f32 to vector<8x128xf32>
    %170 = arith.addf %169, %168 : vector<8x128xf32>
    %171 = arith.divf %169, %170 : vector<8x128xf32>
    %172 = arith.mulf %165, %171 : vector<8x128xf32>
    %c5_79 = arith.constant 5 : index
    %c0_80 = arith.constant 0 : index
    %c0_81 = arith.constant 0 : index
    %173 = vector.load %arg3[%c5_79, %c0_80, %c0_81] : memref<6x16x8xf32, #tpu.memory_space<vmem>>, vector<1x16x8xf32>
    %174 = vector.shape_cast %173 : vector<1x16x8xf32> to vector<16x8xf32>
    %cst_82 = arith.constant dense<0.000000e+00> : vector<16x128xf32>
    %175 = tpu.matmul %174, %172, %cst_82 {dimension_numbers = #tpu.dot_dimension_numbers<[1], [0], [0], [1], [0, 0, 1, 1], [], []>} : vector<16x8xf32>, vector<8x128xf32>, vector<16x128xf32> -> vector<16x128xf32>
    %176 = vector.extract_strided_slice %175 {offsets = [8, 0], sizes = [1, 128], strides = [1, 1]} : vector<16x128xf32> to vector<1x128xf32>
    %177 = arith.addf %147, %176 : vector<1x128xf32>
    %c0_83 = arith.constant 0 : index
    %c0_84 = arith.constant 0 : index
    %178 = vector.load %arg5[%c0_83, %c0_84] : memref<1x1xf32, #tpu.memory_space<vmem>>, vector<1x1xf32>
    %179 = vector.broadcast %178 : vector<1x1xf32> to vector<1x128xf32>
    %180 = arith.addf %177, %179 : vector<1x128xf32>
    %c0_85 = arith.constant 0 : index
    %c0_86 = arith.constant 0 : index
    %181 = vector.load %arg6[%c0_85, %c0_86] : memref<1x128xf32, #tpu.memory_space<vmem>>, vector<1x128xf32>
    tpu.vector_store %arg6[%c0_85, %c0_86], %180 {strides = array<i32>} : memref<1x128xf32, #tpu.memory_space<vmem>>, vector<1x128xf32>,
    return
  }
}

</mosaic_0001>

<llo_original>
// kernel: tpu_custom_call.1
$region0: #{tpu_custom_call.1}
  #allocation0 [shape = 'u32[]', space=smem, size = 0x4, offset = 0x4, fixed_abs, tag = 'smem constant byte address 0x4 - core index']
  #allocation1 [shape = 'u32[144,128]{1,0:T(1,128)}', space=vmem, size = 0x12000, scoped, tag = 'internal scratch']
  #allocation2 [shape = 'f32[1,1]{1,0:T(1,128)S(1)}', space=vmem, size = 0x200, scoped, tag = 'scoped memory for tpu_custom_call.1']
  %s0 = inlined_call_operand.vmem [shape: f32[1,128], index: 0, kind: input, shape index: {}]
  %s1 = inlined_call_operand.vmem [shape: f32[6,16,16], index: 1, kind: input, shape index: {}]
  %s2 = inlined_call_operand.vmem [shape: f32[6,16,1], index: 2, kind: input, shape index: {}]
  %s3 = inlined_call_operand.vmem [shape: f32[6,16,8], index: 3, kind: input, shape index: {}]
  %s4 = inlined_call_operand.vmem [shape: f32[6,8,1], index: 4, kind: input, shape index: {}]
  %s5 = inlined_call_operand.<no memory space> [shape: f32[1,1], index: 5, kind: input, shape index: {}]
  %s6 = inlined_call_operand.hbm [shape: f32[1,128], index: 6, kind: output, shape index: {}]
  %s7 = sld [smem:[#allocation0]]
  $region34: #{tpu_custom_call.1} parent=0
    _
  %s9 = ssub.s32 1, %s7
  %s10 = scalar_select 0, %s9, %s7
  %v11 = vstv %s5
  %12 = vst [vmem:[#allocation2] sm:$0x1] %v11
  $region1: #{tpu_custom_call.1} parent=0
    #allocation3 [shape = 'u8[512]{0}', space=vmem, size = 0x400, scoped, tag = 'output window, operand 0, single buffered']
    #allocation4 [shape = 's32[1]{0}', space=sflag, size = 0x4, scoped, tag = 'scoped memory for tpu_custom_call.1']
    %13 = vsyncpa [#allocation4], 0
    // Predicated region
    $region2: #{tpu_custom_call.1} parent=1 // pred_check
      _
    $region3: #{tpu_custom_call.1} parent=1 // pred_check_branch
      %15 = sbr.rel (0) target = $region5
    $region4: #{tpu_custom_call.1} parent=1 // pred_region
      _
    $region5: #{tpu_custom_call.1} parent=1 // pred_fallthru
      _
    // Predicated region
    $region6: #{tpu_custom_call.1} parent=1 // pred_check
      _
    $region7: #{tpu_custom_call.1} parent=1 // pred_check_branch
      %17 = sbr.rel (0) target = $region9
    $region8: #{tpu_custom_call.1} parent=1 // pred_region
      _
    $region9: #{tpu_custom_call.1} parent=1 // pred_fallthru
      _
    // Predicated region
    $region10: #{tpu_custom_call.1} parent=1 // pred_check
      _
    $region11: #{tpu_custom_call.1} parent=1 // pred_check_branch
      %19 = sbr.rel (0) target = $region13
    $region12: #{tpu_custom_call.1} parent=1 // pred_region
      _
    $region13: #{tpu_custom_call.1} parent=1 // pred_fallthru
      _
    // Predicated region
    $region14: #{tpu_custom_call.1} parent=1 // pred_check
      _
    $region15: #{tpu_custom_call.1} parent=1 // pred_check_branch
      %21 = sbr.rel (0) target = $region17
    $region16: #{tpu_custom_call.1} parent=1 // pred_region
      _
    $region17: #{tpu_custom_call.1} parent=1 // pred_fallthru
      _
    // Predicated region
    $region18: #{tpu_custom_call.1} parent=1 // pred_check
      _
    $region19: #{tpu_custom_call.1} parent=1 // pred_check_branch
      %23 = sbr.rel (0) target = $region21
    $region20: #{tpu_custom_call.1} parent=1 // pred_region
      _
    $region21: #{tpu_custom_call.1} parent=1 // pred_fallthru
      _
    // Predicated region
    $region22: #{tpu_custom_call.1} parent=1 // pred_check
      _
    $region23: #{tpu_custom_call.1} parent=1 // pred_check_branch
      %25 = sbr.rel (0) target = $region25
    $region24: #{tpu_custom_call.1} parent=1 // pred_region
      _
    $region25: #{tpu_custom_call.1} parent=1 // pred_fallthru
      _
    %v26 = vld [vmem:[%s0] sm:$0x1]
    %v28 = vlaneseq
    %v29 = vshrl.u32 %v28, 7
    %v30 = vsub.s32 0, %v29
    %v31 = vrot.slane %v26, %v30
    %33 = vrot.lane.b32.xlu0 %v31, 127
    %v34 = vpop.permute.xlu0 %33
    %v35 = vld [vmem:[%s1] sm:$0xff]
    %v36 = vld [vmem:[%s1 + $0x8] sm:$0xff]
    %v37 = vld [vmem:[%s2] sm:$0xff]
    %v38 = vld [vmem:[%s2 + $0x8] sm:$0xff]
    %40 = vset.pattern.permute.xlu0 0
    %41 = vperm.xlu0 %40, %v37
    %v42 = vpop.permute.xlu0 %41
    %45 = vset.pattern.permute.xlu0 0
    %46 = vperm.xlu0 %45, %v38
    %v47 = vpop.permute.xlu0 %46
    %49 = vrot.lane.b32.xlu0 %v31, 1
    %v50 = vpop.permute.xlu0 %49
    %51 = vrot.lane.b32.xlu0 %v34, 1
    %v52 = vpop.permute.xlu0 %51
    %vm55 = vcmask 130048
    %v57 = vsel %vm55, %v35, 0
    %v60 = vsel %vm55, %v36, 0
    %62 = vmatprep.subr.mxu0 0.0
    %63 = vmatpush1.msra.mxu0 0.0
    %64 = vmatprep.subr.mxu0 0.0
    %65 = vmatpush1.msra.mxu0 0.0
    %66 = vmatprep.subr.mxu0 0.0
    %67 = vmatpush1.msra.mxu0 0.0
    %68 = vmatprep.subr.mxu0 0.0
    %69 = vmatpush1.msra.mxu0 0.0
    %70 = vmatprep.subr.mxu0 0.0
    %71 = vmatpush1.msra.mxu0 0.0
    %72 = vmatprep.subr.mxu0 0.0
    %73 = vmatpush1.msra.mxu0 0.0
    %74 = vmatprep.subr.mxu0 0.0
    %75 = vmatpush1.msra.mxu0 0.0
    %76 = vmatprep.subr.mxu0 0.0
    %77 = vmatpush1.msra.mxu0 0.0
    %78 = vmatprep.subr.mxu0 0.0
    %79 = vmatpush1.msra.mxu0 0.0
    %80 = vmatprep.subr.mxu0 0.0
    %81 = vmatpush1.msra.mxu0 0.0
    %82 = vmatprep.subr.mxu0 0.0
    %83 = vmatpush1.msra.mxu0 0.0
    %84 = vmatprep.subr.mxu0 0.0
    %85 = vmatpush1.msra.mxu0 0.0
    %86 = vmatprep.subr.mxu0 0.0
    %87 = vmatpush1.msra.mxu0 0.0
    %88 = vmatprep.subr.mxu0 0.0
    %89 = vmatpush1.msra.mxu0 0.0
    %90 = vmatprep.subr.mxu0 0.0
    %91 = vmatpush1.msra.mxu0 %v52
    %92 = vmatprep.subr.mxu0 0.0
    %93 = vmatpush1.msra.mxu0 %v50
    %94 = vmatprep.subr.mxu0 0.0
    %95 = vmatpush2.msra.mxu0 0.0
    %96 = vmatprep.subr.mxu0 0.0
    %97 = vmatpush2.msra.mxu0 0.0
    %98 = vmatprep.subr.mxu0 0.0
    %99 = vmatpush2.msra.mxu0 0.0
    %100 = vmatprep.subr.mxu0 0.0
    %101 = vmatpush2.msra.mxu0 0.0
    %102 = vmatprep.subr.mxu0 0.0
    %103 = vmatpush2.msra.mxu0 0.0
    %104 = vmatprep.subr.mxu0 0.0
    %105 = vmatpush2.msra.mxu0 0.0
    %106 = vmatprep.subr.mxu0 0.0
    %107 = vmatpush2.msra.mxu0 0.0
    %108 = vmatprep.subr.mxu0 0.0
    %109 = vmatpush2.msra.mxu0 0.0
    %110 = vmatprep.subr.mxu0 0.0
    %111 = vmatpush2.msra.mxu0 0.0
    %112 = vmatprep.subr.mxu0 0.0
    %113 = vmatpush2.msra.mxu0 0.0
    %114 = vmatprep.subr.mxu0 0.0
    %115 = vmatpush2.msra.mxu0 0.0
    %116 = vmatprep.subr.mxu0 0.0
    %117 = vmatpush2.msra.mxu0 0.0
    %118 = vmatprep.subr.mxu0 0.0
    %119 = vmatpush2.msra.mxu0 0.0
    %120 = vmatprep.subr.mxu0 0.0
    %121 = vmatpush2.msra.mxu0 0.0
    %122 = vmatprep.subr.mxu0 0.0
    %123 = vmatpush2.msra.mxu0 0.0
    %124 = vmatprep.subr.mxu0 0.0
    %125 = vmatpush2.msra.mxu0 0.0
    %126 = vmatprep.mubr.f32.mxu0 0.0
    %127 = vmatmul.mubr.f32.gmra.mxu0 %v57
    %v128 = vpop.f32.mrf.mxu0
    %v129 = vadd.f32 %v42, %v128
    %v130 = vpop.f32.mrf.mxu0
    %131 = vmatprep.mubr.f32.mxu0 0.0
    %132 = vmatmul.mubr.f32.gmra.mxu0 %v60
    %v133 = vpop.f32.mrf.mxu0
    %v134 = vadd.f32 %v47, %v133
    %v135 = vpop.f32.mrf.mxu0
    %136 = vdwg.mxu0
    %v137 = vtanh.pop %v134
    %v138 = vxor.u32 %v129, 2147483648
    %v139 = vmul.f32 %v138, 1.442695
    %v140 = vpow.pop %v139
    %v141 = vadd.f32 %v140, 1.0
    %v142 = vrcp.pop %v141
    %v143 = vmul.f32 1.0, %v142
    %v144 = vmul.f32 %v137, %v143
    %v145 = vld [vmem:[%s3] sm:$0xff]
    %v146 = vld [vmem:[%s3 + $0x8] sm:$0xff]
    %vm147 = vcmask 64512
    %v149 = vsel %vm147, %v145, 0
    %v152 = vsel %vm147, %v146, 0
    %154 = vmatprep.subr.mxu0 0.0
    %155 = vmatpush1.msra.mxu0 0.0
    %156 = vmatprep.subr.mxu0 0.0
    %157 = vmatpush1.msra.mxu0 0.0
    %158 = vmatprep.subr.mxu0 0.0
    %159 = vmatpush1.msra.mxu0 0.0
    %160 = vmatprep.subr.mxu0 0.0
    %161 = vmatpush1.msra.mxu0 0.0
    %162 = vmatprep.subr.mxu0 0.0
    %163 = vmatpush1.msra.mxu0 0.0
    %164 = vmatprep.subr.mxu0 0.0
    %165 = vmatpush1.msra.mxu0 0.0
    %166 = vmatprep.subr.mxu0 0.0
    %167 = vmatpush1.msra.mxu0 0.0
    %168 = vmatprep.subr.mxu0 0.0
    %169 = vmatpush1.msra.mxu0 0.0
    %170 = vmatprep.subr.mxu0 0.0
    %171 = vmatpush1.msra.mxu0 0.0
    %172 = vmatprep.subr.mxu0 0.0
    %173 = vmatpush1.msra.mxu0 0.0
    %174 = vmatprep.subr.mxu0 0.0
    %175 = vmatpush1.msra.mxu0 0.0
    %176 = vmatprep.subr.mxu0 0.0
    %177 = vmatpush1.msra.mxu0 0.0
    %178 = vmatprep.subr.mxu0 0.0
    %179 = vmatpush1.msra.mxu0 0.0
    %180 = vmatprep.subr.mxu0 0.0
    %181 = vmatpush1.msra.mxu0 0.0
    %182 = vmatprep.subr.mxu0 0.0
    %183 = vmatpush1.msra.mxu0 0.0
    %184 = vmatprep.subr.mxu0 0.0
    %185 = vmatpush1.msra.mxu0 %v144
    %186 = vmatprep.subr.mxu0 0.0
    %187 = vmatpush2.msra.mxu0 0.0
    %188 = vmatprep.subr.mxu0 0.0
    %189 = vmatpush2.msra.mxu0 0.0
    %190 = vmatprep.subr.mxu0 0.0
    %191 = vmatpush2.msra.mxu0 0.0
    %192 = vmatprep.subr.mxu0 0.0
    %193 = vmatpush2.msra.mxu0 0.0
    %194 = vmatprep.subr.mxu0 0.0
    %195 = vmatpush2.msra.mxu0 0.0
    %196 = vmatprep.subr.mxu0 0.0
    %197 = vmatpush2.msra.mxu0 0.0
    %198 = vmatprep.subr.mxu0 0.0
    %199 = vmatpush2.msra.mxu0 0.0
    %200 = vmatprep.subr.mxu0 0.0
    %201 = vmatpush2.msra.mxu0 0.0
    %202 = vmatprep.subr.mxu0 0.0
    %203 = vmatpush2.msra.mxu0 0.0
    %204 = vmatprep.subr.mxu0 0.0
    %205 = vmatpush2.msra.mxu0 0.0
    %206 = vmatprep.subr.mxu0 0.0
    %207 = vmatpush2.msra.mxu0 0.0
    %208 = vmatprep.subr.mxu0 0.0
    %209 = vmatpush2.msra.mxu0 0.0
    %210 = vmatprep.subr.mxu0 0.0
    %211 = vmatpush2.msra.mxu0 0.0
    %212 = vmatprep.subr.mxu0 0.0
    %213 = vmatpush2.msra.mxu0 0.0
    %214 = vmatprep.subr.mxu0 0.0
    %215 = vmatpush2.msra.mxu0 0.0
    %216 = vmatprep.subr.mxu0 0.0
    %217 = vmatpush2.msra.mxu0 0.0
    %218 = vmatprep.mubr.f32.mxu0 0.0
    %219 = vmatmul.mubr.f32.gmra.mxu0 %v149
    %v220 = vpop.f32.mrf.mxu0
    %v221 = vadd.f32 0.0, %v220
    %v222 = vpop.f32.mrf.mxu0
    %223 = vmatprep.mubr.f32.mxu0 0.0
    %224 = vmatmul.mubr.f32.gmra.mxu0 %v152
    %v225 = vpop.f32.mrf.mxu0
    %v226 = vadd.f32 0.0, %v225
    %v227 = vpop.f32.mrf.mxu0
    %228 = vdwg.mxu0
    %v229 = vadd.f32 %v226, 0.0
    %v230 = vld [vmem:[%s4] sm:$0xff]
    %232 = vset.pattern.permute.xlu0 0
    %233 = vperm.xlu0 %232, %v230
    %v234 = vpop.permute.xlu0 %233
    %v236 = vadd.f32 %v221, %v234
    %v237 = vadd.f32 %v236, %v31
    %239 = vrot.lane.b32.xlu0 %v237, 126
    %v240 = vpop.permute.xlu0 %239
    %s241 = scalar_lea.vmem %s1, 16
    %v242 = vld [vmem:[%s241] sm:$0xff]
    %v243 = vld [vmem:[%s241 + $0x8] sm:$0xff]
    %s244 = scalar_lea.vmem %s2, 16
    %v245 = vld [vmem:[%s244] sm:$0xff]
    %v246 = vld [vmem:[%s244 + $0x8] sm:$0xff]
    %248 = vset.pattern.permute.xlu0 0
    %249 = vperm.xlu0 %248, %v245
    %v250 = vpop.permute.xlu0 %249
    %253 = vset.pattern.permute.xlu0 0
    %254 = vperm.xlu0 %253, %v246
    %v255 = vpop.permute.xlu0 %254
    %257 = vrot.lane.b32.xlu0 %v237, 2
    %v258 = vpop.permute.xlu0 %257
    %259 = vrot.lane.b32.xlu0 %v240, 2
    %v260 = vpop.permute.xlu0 %259
    %v264 = vsel %vm55, %v242, 0
    %v267 = vsel %vm55, %v243, 0
    %269 = vmatprep.subr.mxu0 0.0
    %270 = vmatpush1.msra.mxu0 0.0
    %271 = vmatprep.subr.mxu0 0.0
    %272 = vmatpush1.msra.mxu0 0.0
    %273 = vmatprep.subr.mxu0 0.0
    %274 = vmatpush1.msra.mxu0 0.0
    %275 = vmatprep.subr.mxu0 0.0
    %276 = vmatpush1.msra.mxu0 0.0
    %277 = vmatprep.subr.mxu0 0.0
    %278 = vmatpush1.msra.mxu0 0.0
    %279 = vmatprep.subr.mxu0 0.0
    %280 = vmatpush1.msra.mxu0 0.0
    %281 = vmatprep.subr.mxu0 0.0
    %282 = vmatpush1.msra.mxu0 0.0
    %283 = vmatprep.subr.mxu0 0.0
    %284 = vmatpush1.msra.mxu0 0.0
    %285 = vmatprep.subr.mxu0 0.0
    %286 = vmatpush1.msra.mxu0 0.0
    %287 = vmatprep.subr.mxu0 0.0
    %288 = vmatpush1.msra.mxu0 0.0
    %289 = vmatprep.subr.mxu0 0.0
    %290 = vmatpush1.msra.mxu0 0.0
    %291 = vmatprep.subr.mxu0 0.0
    %292 = vmatpush1.msra.mxu0 0.0
    %293 = vmatprep.subr.mxu0 0.0
    %294 = vmatpush1.msra.mxu0 0.0
    %295 = vmatprep.subr.mxu0 0.0
    %296 = vmatpush1.msra.mxu0 0.0
    %297 = vmatprep.subr.mxu0 0.0
    %298 = vmatpush1.msra.mxu0 %v260
    %299 = vmatprep.subr.mxu0 0.0
    %300 = vmatpush1.msra.mxu0 %v258
    %301 = vmatprep.subr.mxu0 0.0
    %302 = vmatpush2.msra.mxu0 0.0
    %303 = vmatprep.subr.mxu0 0.0
    %304 = vmatpush2.msra.mxu0 0.0
    %305 = vmatprep.subr.mxu0 0.0
    %306 = vmatpush2.msra.mxu0 0.0
    %307 = vmatprep.subr.mxu0 0.0
    %308 = vmatpush2.msra.mxu0 0.0
    %309 = vmatprep.subr.mxu0 0.0
    %310 = vmatpush2.msra.mxu0 0.0
    %311 = vmatprep.subr.mxu0 0.0
    %312 = vmatpush2.msra.mxu0 0.0
    %313 = vmatprep.subr.mxu0 0.0
    %314 = vmatpush2.msra.mxu0 0.0
    %315 = vmatprep.subr.mxu0 0.0
    %316 = vmatpush2.msra.mxu0 0.0
    %317 = vmatprep.subr.mxu0 0.0
    %318 = vmatpush2.msra.mxu0 0.0
    %319 = vmatprep.subr.mxu0 0.0
    %320 = vmatpush2.msra.mxu0 0.0
    %321 = vmatprep.subr.mxu0 0.0
    %322 = vmatpush2.msra.mxu0 0.0
    %323 = vmatprep.subr.mxu0 0.0
    %324 = vmatpush2.msra.mxu0 0.0
    %325 = vmatprep.subr.mxu0 0.0
    %326 = vmatpush2.msra.mxu0 0.0
    %327 = vmatprep.subr.mxu0 0.0
    %328 = vmatpush2.msra.mxu0 0.0
    %329 = vmatprep.subr.mxu0 0.0
    %330 = vmatpush2.msra.mxu0 0.0
    %331 = vmatprep.subr.mxu0 0.0
    %332 = vmatpush2.msra.mxu0 0.0
    %333 = vmatprep.mubr.f32.mxu0 0.0
    %334 = vmatmul.mubr.f32.gmra.mxu0 %v264
    %v335 = vpop.f32.mrf.mxu0
    %v336 = vadd.f32 %v250, %v335
    %v337 = vpop.f32.mrf.mxu0
    %338 = vmatprep.mubr.f32.mxu0 0.0
    %339 = vmatmul.mubr.f32.gmra.mxu0 %v267
    %v340 = vpop.f32.mrf.mxu0
    %v341 = vadd.f32 %v255, %v340
    %v342 = vpop.f32.mrf.mxu0
    %343 = vdwg.mxu0
    %v344 = vtanh.pop %v341
    %v345 = vxor.u32 %v336, 2147483648
    %v346 = vmul.f32 %v345, 1.442695
    %v347 = vpow.pop %v346
    %v348 = vadd.f32 %v347, 1.0
    %v349 = vrcp.pop %v348
    %v350 = vmul.f32 1.0, %v349
    %v351 = vmul.f32 %v344, %v350
    %s352 = scalar_lea.vmem %s3, 16
    %v353 = vld [vmem:[%s352] sm:$0xff]
    %v354 = vld [vmem:[%s352 + $0x8] sm:$0xff]
    %v356 = vsel %vm147, %v353, 0
    %v359 = vsel %vm147, %v354, 0
    %361 = vmatprep.subr.mxu0 0.0
    %362 = vmatpush1.msra.mxu0 0.0
    %363 = vmatprep.subr.mxu0 0.0
    %364 = vmatpush1.msra.mxu0 0.0
    %365 = vmatprep.subr.mxu0 0.0
    %366 = vmatpush1.msra.mxu0 0.0
    %367 = vmatprep.subr.mxu0 0.0
    %368 = vmatpush1.msra.mxu0 0.0
    %369 = vmatprep.subr.mxu0 0.0
    %370 = vmatpush1.msra.mxu0 0.0
    %371 = vmatprep.subr.mxu0 0.0
    %372 = vmatpush1.msra.mxu0 0.0
    %373 = vmatprep.subr.mxu0 0.0
    %374 = vmatpush1.msra.mxu0 0.0
    %375 = vmatprep.subr.mxu0 0.0
    %376 = vmatpush1.msra.mxu0 0.0
    %377 = vmatprep.subr.mxu0 0.0
    %378 = vmatpush1.msra.mxu0 0.0
    %379 = vmatprep.subr.mxu0 0.0
    %380 = vmatpush1.msra.mxu0 0.0
    %381 = vmatprep.subr.mxu0 0.0
    %382 = vmatpush1.msra.mxu0 0.0
    %383 = vmatprep.subr.mxu0 0.0
    %384 = vmatpush1.msra.mxu0 0.0
    %385 = vmatprep.subr.mxu0 0.0
    %386 = vmatpush1.msra.mxu0 0.0
    %387 = vmatprep.subr.mxu0 0.0
    %388 = vmatpush1.msra.mxu0 0.0
    %389 = vmatprep.subr.mxu0 0.0
    %390 = vmatpush1.msra.mxu0 0.0
    %391 = vmatprep.subr.mxu0 0.0
    %392 = vmatpush1.msra.mxu0 %v351
    %393 = vmatprep.subr.mxu0 0.0
    %394 = vmatpush2.msra.mxu0 0.0
    %395 = vmatprep.subr.mxu0 0.0
    %396 = vmatpush2.msra.mxu0 0.0
    %397 = vmatprep.subr.mxu0 0.0
    %398 = vmatpush2.msra.mxu0 0.0
    %399 = vmatprep.subr.mxu0 0.0
    %400 = vmatpush2.msra.mxu0 0.0
    %401 = vmatprep.subr.mxu0 0.0
    %402 = vmatpush2.msra.mxu0 0.0
    %403 = vmatprep.subr.mxu0 0.0
    %404 = vmatpush2.msra.mxu0 0.0
    %405 = vmatprep.subr.mxu0 0.0
    %406 = vmatpush2.msra.mxu0 0.0
    %407 = vmatprep.subr.mxu0 0.0
    %408 = vmatpush2.msra.mxu0 0.0
    %409 = vmatprep.subr.mxu0 0.0
    %410 = vmatpush2.msra.mxu0 0.0
    %411 = vmatprep.subr.mxu0 0.0
    %412 = vmatpush2.msra.mxu0 0.0
    %413 = vmatprep.subr.mxu0 0.0
    %414 = vmatpush2.msra.mxu0 0.0
    %415 = vmatprep.subr.mxu0 0.0
    %416 = vmatpush2.msra.mxu0 0.0
    %417 = vmatprep.subr.mxu0 0.0
    %418 = vmatpush2.msra.mxu0 0.0
    %419 = vmatprep.subr.mxu0 0.0
    %420 = vmatpush2.msra.mxu0 0.0
    %421 = vmatprep.subr.mxu0 0.0
    %422 = vmatpush2.msra.mxu0 0.0
    %423 = vmatprep.subr.mxu0 0.0
    %424 = vmatpush2.msra.mxu0 0.0
    %425 = vmatprep.mubr.f32.mxu0 0.0
    %426 = vmatmul.mubr.f32.gmra.mxu0 %v356
    %v427 = vpop.f32.mrf.mxu0
    %v428 = vadd.f32 0.0, %v427
    %v429 = vpop.f32.mrf.mxu0
    %430 = vmatprep.mubr.f32.mxu0 0.0
    %431 = vmatmul.mubr.f32.gmra.mxu0 %v359
    %v432 = vpop.f32.mrf.mxu0
    %v433 = vadd.f32 0.0, %v432
    %v434 = vpop.f32.mrf.mxu0
    %435 = vdwg.mxu0
    %v436 = vadd.f32 %v229, %v433
    %s437 = scalar_lea.vmem %s4, 8
    %v438 = vld [vmem:[%s437] sm:$0xff]
    %440 = vset.pattern.permute.xlu0 0
    %441 = vperm.xlu0 %440, %v438
    %v442 = vpop.permute.xlu0 %441
    %v444 = vadd.f32 %v428, %v442
    %v445 = vadd.f32 %v444, %v237
    %447 = vrot.lane.b32.xlu0 %v445, 124
    %v448 = vpop.permute.xlu0 %447
    %s449 = scalar_lea.vmem %s1, 32
    %v450 = vld [vmem:[%s449] sm:$0xff]
    %v451 = vld [vmem:[%s449 + $0x8] sm:$0xff]
    %s452 = scalar_lea.vmem %s2, 32
    %v453 = vld [vmem:[%s452] sm:$0xff]
    %v454 = vld [vmem:[%s452 + $0x8] sm:$0xff]
    %456 = vset.pattern.permute.xlu0 0
    %457 = vperm.xlu0 %456, %v453
    %v458 = vpop.permute.xlu0 %457
    %461 = vset.pattern.permute.xlu0 0
    %462 = vperm.xlu0 %461, %v454
    %v463 = vpop.permute.xlu0 %462
    %465 = vrot.lane.b32.xlu0 %v445, 4
    %v466 = vpop.permute.xlu0 %465
    %467 = vrot.lane.b32.xlu0 %v448, 4
    %v468 = vpop.permute.xlu0 %467
    %v472 = vsel %vm55, %v450, 0
    %v475 = vsel %vm55, %v451, 0
    %477 = vmatprep.subr.mxu0 0.0
    %478 = vmatpush1.msra.mxu0 0.0
    %479 = vmatprep.subr.mxu0 0.0
    %480 = vmatpush1.msra.mxu0 0.0
    %481 = vmatprep.subr.mxu0 0.0
    %482 = vmatpush1.msra.mxu0 0.0
    %483 = vmatprep.subr.mxu0 0.0
    %484 = vmatpush1.msra.mxu0 0.0
    %485 = vmatprep.subr.mxu0 0.0
    %486 = vmatpush1.msra.mxu0 0.0
    %487 = vmatprep.subr.mxu0 0.0
    %488 = vmatpush1.msra.mxu0 0.0
    %489 = vmatprep.subr.mxu0 0.0
    %490 = vmatpush1.msra.mxu0 0.0
    %491 = vmatprep.subr.mxu0 0.0
    %492 = vmatpush1.msra.mxu0 0.0
    %493 = vmatprep.subr.mxu0 0.0
    %494 = vmatpush1.msra.mxu0 0.0
    %495 = vmatprep.subr.mxu0 0.0
    %496 = vmatpush1.msra.mxu0 0.0
    %497 = vmatprep.subr.mxu0 0.0
    %498 = vmatpush1.msra.mxu0 0.0
    %499 = vmatprep.subr.mxu0 0.0
    %500 = vmatpush1.msra.mxu0 0.0
    %501 = vmatprep.subr.mxu0 0.0
    %502 = vmatpush1.msra.mxu0 0.0
    %503 = vmatprep.subr.mxu0 0.0
    %504 = vmatpush1.msra.mxu0 0.0
    %505 = vmatprep.subr.mxu0 0.0
    %506 = vmatpush1.msra.mxu0 %v468
    %507 = vmatprep.subr.mxu0 0.0
    %508 = vmatpush1.msra.mxu0 %v466
    %509 = vmatprep.subr.mxu0 0.0
    %510 = vmatpush2.msra.mxu0 0.0
    %511 = vmatprep.subr.mxu0 0.0
    %512 = vmatpush2.msra.mxu0 0.0
    %513 = vmatprep.subr.mxu0 0.0
    %514 = vmatpush2.msra.mxu0 0.0
    %515 = vmatprep.subr.mxu0 0.0
    %516 = vmatpush2.msra.mxu0 0.0
    %517 = vmatprep.subr.mxu0 0.0
    %518 = vmatpush2.msra.mxu0 0.0
    %519 = vmatprep.subr.mxu0 0.0
    %520 = vmatpush2.msra.mxu0 0.0
    %521 = vmatprep.subr.mxu0 0.0
    %522 = vmatpush2.msra.mxu0 0.0
    %523 = vmatprep.subr.mxu0 0.0
    %524 = vmatpush2.msra.mxu0 0.0
    %525 = vmatprep.subr.mxu0 0.0
    %526 = vmatpush2.msra.mxu0 0.0
    %527 = vmatprep.subr.mxu0 0.0
    %528 = vmatpush2.msra.mxu0 0.0
    %529 = vmatprep.subr.mxu0 0.0
    %530 = vmatpush2.msra.mxu0 0.0
    %531 = vmatprep.subr.mxu0 0.0
    %532 = vmatpush2.msra.mxu0 0.0
    %533 = vmatprep.subr.mxu0 0.0
    %534 = vmatpush2.msra.mxu0 0.0
    %535 = vmatprep.subr.mxu0 0.0
    %536 = vmatpush2.msra.mxu0 0.0
    %537 = vmatprep.subr.mxu0 0.0
    %538 = vmatpush2.msra.mxu0 0.0
    %539 = vmatprep.subr.mxu0 0.0
    %540 = vmatpush2.msra.mxu0 0.0
    %541 = vmatprep.mubr.f32.mxu0 0.0
    %542 = vmatmul.mubr.f32.gmra.mxu0 %v472
    %v543 = vpop.f32.mrf.mxu0
    %v544 = vadd.f32 %v458, %v543
    %v545 = vpop.f32.mrf.mxu0
    %546 = vmatprep.mubr.f32.mxu0 0.0
    %547 = vmatmul.mubr.f32.gmra.mxu0 %v475
    %v548 = vpop.f32.mrf.mxu0
    %v549 = vadd.f32 %v463, %v548
    %v550 = vpop.f32.mrf.mxu0
    %551 = vdwg.mxu0
    %v552 = vtanh.pop %v549
    %v553 = vxor.u32 %v544, 2147483648
    %v554 = vmul.f32 %v553, 1.442695
    %v555 = vpow.pop %v554
    %v556 = vadd.f32 %v555, 1.0
    %v557 = vrcp.pop %v556
    %v558 = vmul.f32 1.0, %v557
    %v559 = vmul.f32 %v552, %v558
    %s560 = scalar_lea.vmem %s3, 32
    %v561 = vld [vmem:[%s560] sm:$0xff]
    %v562 = vld [vmem:[%s560 + $0x8] sm:$0xff]
    %v564 = vsel %vm147, %v561, 0
    %v567 = vsel %vm147, %v562, 0
    %569 = vmatprep.subr.mxu0 0.0
    %570 = vmatpush1.msra.mxu0 0.0
    %571 = vmatprep.subr.mxu0 0.0
    %572 = vmatpush1.msra.mxu0 0.0
    %573 = vmatprep.subr.mxu0 0.0
    %574 = vmatpush1.msra.mxu0 0.0
    %575 = vmatprep.subr.mxu0 0.0
    %576 = vmatpush1.msra.mxu0 0.0
    %577 = vmatprep.subr.mxu0 0.0
    %578 = vmatpush1.msra.mxu0 0.0
    %579 = vmatprep.subr.mxu0 0.0
    %580 = vmatpush1.msra.mxu0 0.0
    %581 = vmatprep.subr.mxu0 0.0
    %582 = vmatpush1.msra.mxu0 0.0
    %583 = vmatprep.subr.mxu0 0.0
    %584 = vmatpush1.msra.mxu0 0.0
    %585 = vmatprep.subr.mxu0 0.0
    %586 = vmatpush1.msra.mxu0 0.0
    %587 = vmatprep.subr.mxu0 0.0
    %588 = vmatpush1.msra.mxu0 0.0
    %589 = vmatprep.subr.mxu0 0.0
    %590 = vmatpush1.msra.mxu0 0.0
    %591 = vmatprep.subr.mxu0 0.0
    %592 = vmatpush1.msra.mxu0 0.0
    %593 = vmatprep.subr.mxu0 0.0
    %594 = vmatpush1.msra.mxu0 0.0
    %595 = vmatprep.subr.mxu0 0.0
    %596 = vmatpush1.msra.mxu0 0.0
    %597 = vmatprep.subr.mxu0 0.0
    %598 = vmatpush1.msra.mxu0 0.0
    %599 = vmatprep.subr.mxu0 0.0
    %600 = vmatpush1.msra.mxu0 %v559
    %601 = vmatprep.subr.mxu0 0.0
    %602 = vmatpush2.msra.mxu0 0.0
    %603 = vmatprep.subr.mxu0 0.0
    %604 = vmatpush2.msra.mxu0 0.0
    %605 = vmatprep.subr.mxu0 0.0
    %606 = vmatpush2.msra.mxu0 0.0
    %607 = vmatprep.subr.mxu0 0.0
    %608 = vmatpush2.msra.mxu0 0.0
    %609 = vmatprep.subr.mxu0 0.0
    %610 = vmatpush2.msra.mxu0 0.0
    %611 = vmatprep.subr.mxu0 0.0
    %612 = vmatpush2.msra.mxu0 0.0
    %613 = vmatprep.subr.mxu0 0.0
    %614 = vmatpush2.msra.mxu0 0.0
    %615 = vmatprep.subr.mxu0 0.0
    %616 = vmatpush2.msra.mxu0 0.0
    %617 = vmatprep.subr.mxu0 0.0
    %618 = vmatpush2.msra.mxu0 0.0
    %619 = vmatprep.subr.mxu0 0.0
    %620 = vmatpush2.msra.mxu0 0.0
    %621 = vmatprep.subr.mxu0 0.0
    %622 = vmatpush2.msra.mxu0 0.0
    %623 = vmatprep.subr.mxu0 0.0
    %624 = vmatpush2.msra.mxu0 0.0
    %625 = vmatprep.subr.mxu0 0.0
    %626 = vmatpush2.msra.mxu0 0.0
    %627 = vmatprep.subr.mxu0 0.0
    %628 = vmatpush2.msra.mxu0 0.0
    %629 = vmatprep.subr.mxu0 0.0
    %630 = vmatpush2.msra.mxu0 0.0
    %631 = vmatprep.subr.mxu0 0.0
    %632 = vmatpush2.msra.mxu0 0.0
    %633 = vmatprep.mubr.f32.mxu0 0.0
    %634 = vmatmul.mubr.f32.gmra.mxu0 %v564
    %v635 = vpop.f32.mrf.mxu0
    %v636 = vadd.f32 0.0, %v635
    %v637 = vpop.f32.mrf.mxu0
    %638 = vmatprep.mubr.f32.mxu0 0.0
    %639 = vmatmul.mubr.f32.gmra.mxu0 %v567
    %v640 = vpop.f32.mrf.mxu0
    %v641 = vadd.f32 0.0, %v640
    %v642 = vpop.f32.mrf.mxu0
    %643 = vdwg.mxu0
    %v644 = vadd.f32 %v436, %v641
    %s645 = scalar_lea.vmem %s4, 16
    %v646 = vld [vmem:[%s645] sm:$0xff]
    %648 = vset.pattern.permute.xlu0 0
    %649 = vperm.xlu0 %648, %v646
    %v650 = vpop.permute.xlu0 %649
    %v652 = vadd.f32 %v636, %v650
    %v653 = vadd.f32 %v652, %v445
    %655 = vrot.lane.b32.xlu0 %v653, 127
    %v656 = vpop.permute.xlu0 %655
    %s657 = scalar_lea.vmem %s1, 48
    %v658 = vld [vmem:[%s657] sm:$0xff]
    %v659 = vld [vmem:[%s657 + $0x8] sm:$0xff]
    %s660 = scalar_lea.vmem %s2, 48
    %v661 = vld [vmem:[%s660] sm:$0xff]
    %v662 = vld [vmem:[%s660 + $0x8] sm:$0xff]
    %664 = vset.pattern.permute.xlu0 0
    %665 = vperm.xlu0 %664, %v661
    %v666 = vpop.permute.xlu0 %665
    %669 = vset.pattern.permute.xlu0 0
    %670 = vperm.xlu0 %669, %v662
    %v671 = vpop.permute.xlu0 %670
    %673 = vrot.lane.b32.xlu0 %v653, 1
    %v674 = vpop.permute.xlu0 %673
    %675 = vrot.lane.b32.xlu0 %v656, 1
    %v676 = vpop.permute.xlu0 %675
    %v680 = vsel %vm55, %v658, 0
    %v683 = vsel %vm55, %v659, 0
    %685 = vmatprep.subr.mxu0 0.0
    %686 = vmatpush1.msra.mxu0 0.0
    %687 = vmatprep.subr.mxu0 0.0
    %688 = vmatpush1.msra.mxu0 0.0
    %689 = vmatprep.subr.mxu0 0.0
    %690 = vmatpush1.msra.mxu0 0.0
    %691 = vmatprep.subr.mxu0 0.0
    %692 = vmatpush1.msra.mxu0 0.0
    %693 = vmatprep.subr.mxu0 0.0
    %694 = vmatpush1.msra.mxu0 0.0
    %695 = vmatprep.subr.mxu0 0.0
    %696 = vmatpush1.msra.mxu0 0.0
    %697 = vmatprep.subr.mxu0 0.0
    %698 = vmatpush1.msra.mxu0 0.0
    %699 = vmatprep.subr.mxu0 0.0
    %700 = vmatpush1.msra.mxu0 0.0
    %701 = vmatprep.subr.mxu0 0.0
    %702 = vmatpush1.msra.mxu0 0.0
    %703 = vmatprep.subr.mxu0 0.0
    %704 = vmatpush1.msra.mxu0 0.0
    %705 = vmatprep.subr.mxu0 0.0
    %706 = vmatpush1.msra.mxu0 0.0
    %707 = vmatprep.subr.mxu0 0.0
    %708 = vmatpush1.msra.mxu0 0.0
    %709 = vmatprep.subr.mxu0 0.0
    %710 = vmatpush1.msra.mxu0 0.0
    %711 = vmatprep.subr.mxu0 0.0
    %712 = vmatpush1.msra.mxu0 0.0
    %713 = vmatprep.subr.mxu0 0.0
    %714 = vmatpush1.msra.mxu0 %v676
    %715 = vmatprep.subr.mxu0 0.0
    %716 = vmatpush1.msra.mxu0 %v674
    %717 = vmatprep.subr.mxu0 0.0
    %718 = vmatpush2.msra.mxu0 0.0
    %719 = vmatprep.subr.mxu0 0.0
    %720 = vmatpush2.msra.mxu0 0.0
    %721 = vmatprep.subr.mxu0 0.0
    %722 = vmatpush2.msra.mxu0 0.0
    %723 = vmatprep.subr.mxu0 0.0
    %724 = vmatpush2.msra.mxu0 0.0
    %725 = vmatprep.subr.mxu0 0.0
    %726 = vmatpush2.msra.mxu0 0.0
    %727 = vmatprep.subr.mxu0 0.0
    %728 = vmatpush2.msra.mxu0 0.0
    %729 = vmatprep.subr.mxu0 0.0
    %730 = vmatpush2.msra.mxu0 0.0
    %731 = vmatprep.subr.mxu0 0.0
    %732 = vmatpush2.msra.mxu0 0.0
    %733 = vmatprep.subr.mxu0 0.0
    %734 = vmatpush2.msra.mxu0 0.0
    %735 = vmatprep.subr.mxu0 0.0
    %736 = vmatpush2.msra.mxu0 0.0
    %737 = vmatprep.subr.mxu0 0.0
    %738 = vmatpush2.msra.mxu0 0.0
    %739 = vmatprep.subr.mxu0 0.0
    %740 = vmatpush2.msra.mxu0 0.0
    %741 = vmatprep.subr.mxu0 0.0
    %742 = vmatpush2.msra.mxu0 0.0
    %743 = vmatprep.subr.mxu0 0.0
    %744 = vmatpush2.msra.mxu0 0.0
    %745 = vmatprep.subr.mxu0 0.0
    %746 = vmatpush2.msra.mxu0 0.0
    %747 = vmatprep.subr.mxu0 0.0
    %748 = vmatpush2.msra.mxu0 0.0
    %749 = vmatprep.mubr.f32.mxu0 0.0
    %750 = vmatmul.mubr.f32.gmra.mxu0 %v680
    %v751 = vpop.f32.mrf.mxu0
    %v752 = vadd.f32 %v666, %v751
    %v753 = vpop.f32.mrf.mxu0
    %754 = vmatprep.mubr.f32.mxu0 0.0
    %755 = vmatmul.mubr.f32.gmra.mxu0 %v683
    %v756 = vpop.f32.mrf.mxu0
    %v757 = vadd.f32 %v671, %v756
    %v758 = vpop.f32.mrf.mxu0
    %759 = vdwg.mxu0
    %v760 = vtanh.pop %v757
    %v761 = vxor.u32 %v752, 2147483648
    %v762 = vmul.f32 %v761, 1.442695
    %v763 = vpow.pop %v762
    %v764 = vadd.f32 %v763, 1.0
    %v765 = vrcp.pop %v764
    %v766 = vmul.f32 1.0, %v765
    %v767 = vmul.f32 %v760, %v766
    %s768 = scalar_lea.vmem %s3, 48
    %v769 = vld [vmem:[%s768] sm:$0xff]
    %v770 = vld [vmem:[%s768 + $0x8] sm:$0xff]
    %v772 = vsel %vm147, %v769, 0
    %v775 = vsel %vm147, %v770, 0
    %777 = vmatprep.subr.mxu0 0.0
    %778 = vmatpush1.msra.mxu0 0.0
    %779 = vmatprep.subr.mxu0 0.0
    %780 = vmatpush1.msra.mxu0 0.0
    %781 = vmatprep.subr.mxu0 0.0
    %782 = vmatpush1.msra.mxu0 0.0
    %783 = vmatprep.subr.mxu0 0.0
    %784 = vmatpush1.msra.mxu0 0.0
    %785 = vmatprep.subr.mxu0 0.0
    %786 = vmatpush1.msra.mxu0 0.0
    %787 = vmatprep.subr.mxu0 0.0
    %788 = vmatpush1.msra.mxu0 0.0
    %789 = vmatprep.subr.mxu0 0.0
    %790 = vmatpush1.msra.mxu0 0.0
    %791 = vmatprep.subr.mxu0 0.0
    %792 = vmatpush1.msra.mxu0 0.0
    %793 = vmatprep.subr.mxu0 0.0
    %794 = vmatpush1.msra.mxu0 0.0
    %795 = vmatprep.subr.mxu0 0.0
    %796 = vmatpush1.msra.mxu0 0.0
    %797 = vmatprep.subr.mxu0 0.0
    %798 = vmatpush1.msra.mxu0 0.0
    %799 = vmatprep.subr.mxu0 0.0
    %800 = vmatpush1.msra.mxu0 0.0
    %801 = vmatprep.subr.mxu0 0.0
    %802 = vmatpush1.msra.mxu0 0.0
    %803 = vmatprep.subr.mxu0 0.0
    %804 = vmatpush1.msra.mxu0 0.0
    %805 = vmatprep.subr.mxu0 0.0
    %806 = vmatpush1.msra.mxu0 0.0
    %807 = vmatprep.subr.mxu0 0.0
    %808 = vmatpush1.msra.mxu0 %v767
    %809 = vmatprep.subr.mxu0 0.0
    %810 = vmatpush2.msra.mxu0 0.0
    %811 = vmatprep.subr.mxu0 0.0
    %812 = vmatpush2.msra.mxu0 0.0
    %813 = vmatprep.subr.mxu0 0.0
    %814 = vmatpush2.msra.mxu0 0.0
    %815 = vmatprep.subr.mxu0 0.0
    %816 = vmatpush2.msra.mxu0 0.0
    %817 = vmatprep.subr.mxu0 0.0
    %818 = vmatpush2.msra.mxu0 0.0
    %819 = vmatprep.subr.mxu0 0.0
    %820 = vmatpush2.msra.mxu0 0.0
    %821 = vmatprep.subr.mxu0 0.0
    %822 = vmatpush2.msra.mxu0 0.0
    %823 = vmatprep.subr.mxu0 0.0
    %824 = vmatpush2.msra.mxu0 0.0
    %825 = vmatprep.subr.mxu0 0.0
    %826 = vmatpush2.msra.mxu0 0.0
    %827 = vmatprep.subr.mxu0 0.0
    %828 = vmatpush2.msra.mxu0 0.0
    %829 = vmatprep.subr.mxu0 0.0
    %830 = vmatpush2.msra.mxu0 0.0
    %831 = vmatprep.subr.mxu0 0.0
    %832 = vmatpush2.msra.mxu0 0.0
    %833 = vmatprep.subr.mxu0 0.0
    %834 = vmatpush2.msra.mxu0 0.0
    %835 = vmatprep.subr.mxu0 0.0
    %836 = vmatpush2.msra.mxu0 0.0
    %837 = vmatprep.subr.mxu0 0.0
    %838 = vmatpush2.msra.mxu0 0.0
    %839 = vmatprep.subr.mxu0 0.0
    %840 = vmatpush2.msra.mxu0 0.0
    %841 = vmatprep.mubr.f32.mxu0 0.0
    %842 = vmatmul.mubr.f32.gmra.mxu0 %v772
    %v843 = vpop.f32.mrf.mxu0
    %v844 = vadd.f32 0.0, %v843
    %v845 = vpop.f32.mrf.mxu0
    %846 = vmatprep.mubr.f32.mxu0 0.0
    %847 = vmatmul.mubr.f32.gmra.mxu0 %v775
    %v848 = vpop.f32.mrf.mxu0
    %v849 = vadd.f32 0.0, %v848
    %v850 = vpop.f32.mrf.mxu0
    %851 = vdwg.mxu0
    %v852 = vadd.f32 %v644, %v849
    %s853 = scalar_lea.vmem %s4, 24
    %v854 = vld [vmem:[%s853] sm:$0xff]
    %856 = vset.pattern.permute.xlu0 0
    %857 = vperm.xlu0 %856, %v854
    %v858 = vpop.permute.xlu0 %857
    %v860 = vadd.f32 %v844, %v858
    %v861 = vadd.f32 %v860, %v653
    %863 = vrot.lane.b32.xlu0 %v861, 126
    %v864 = vpop.permute.xlu0 %863
    %s865 = scalar_lea.vmem %s1, 64
    %v866 = vld [vmem:[%s865] sm:$0xff]
    %v867 = vld [vmem:[%s865 + $0x8] sm:$0xff]
    %s868 = scalar_lea.vmem %s2, 64
    %v869 = vld [vmem:[%s868] sm:$0xff]
    %v870 = vld [vmem:[%s868 + $0x8] sm:$0xff]
    %872 = vset.pattern.permute.xlu0 0
    %873 = vperm.xlu0 %872, %v869
    %v874 = vpop.permute.xlu0 %873
    %877 = vset.pattern.permute.xlu0 0
    %878 = vperm.xlu0 %877, %v870
    %v879 = vpop.permute.xlu0 %878
    %881 = vrot.lane.b32.xlu0 %v861, 2
    %v882 = vpop.permute.xlu0 %881
    %883 = vrot.lane.b32.xlu0 %v864, 2
    %v884 = vpop.permute.xlu0 %883
    %v888 = vsel %vm55, %v866, 0
    %v891 = vsel %vm55, %v867, 0
    %893 = vmatprep.subr.mxu0 0.0
    %894 = vmatpush1.msra.mxu0 0.0
    %895 = vmatprep.subr.mxu0 0.0
    %896 = vmatpush1.msra.mxu0 0.0
    %897 = vmatprep.subr.mxu0 0.0
    %898 = vmatpush1.msra.mxu0 0.0
    %899 = vmatprep.subr.mxu0 0.0
    %900 = vmatpush1.msra.mxu0 0.0
    %901 = vmatprep.subr.mxu0 0.0
    %902 = vmatpush1.msra.mxu0 0.0
    %903 = vmatprep.subr.mxu0 0.0
    %904 = vmatpush1.msra.mxu0 0.0
    %905 = vmatprep.subr.mxu0 0.0
    %906 = vmatpush1.msra.mxu0 0.0
    %907 = vmatprep.subr.mxu0 0.0
    %908 = vmatpush1.msra.mxu0 0.0
    %909 = vmatprep.subr.mxu0 0.0
    %910 = vmatpush1.msra.mxu0 0.0
    %911 = vmatprep.subr.mxu0 0.0
    %912 = vmatpush1.msra.mxu0 0.0
    %913 = vmatprep.subr.mxu0 0.0
    %914 = vmatpush1.msra.mxu0 0.0
    %915 = vmatprep.subr.mxu0 0.0
    %916 = vmatpush1.msra.mxu0 0.0
    %917 = vmatprep.subr.mxu0 0.0
    %918 = vmatpush1.msra.mxu0 0.0
    %919 = vmatprep.subr.mxu0 0.0
    %920 = vmatpush1.msra.mxu0 0.0
    %921 = vmatprep.subr.mxu0 0.0
    %922 = vmatpush1.msra.mxu0 %v884
    %923 = vmatprep.subr.mxu0 0.0
    %924 = vmatpush1.msra.mxu0 %v882
    %925 = vmatprep.subr.mxu0 0.0
    %926 = vmatpush2.msra.mxu0 0.0
    %927 = vmatprep.subr.mxu0 0.0
    %928 = vmatpush2.msra.mxu0 0.0
    %929 = vmatprep.subr.mxu0 0.0
    %930 = vmatpush2.msra.mxu0 0.0
    %931 = vmatprep.subr.mxu0 0.0
    %932 = vmatpush2.msra.mxu0 0.0
    %933 = vmatprep.subr.mxu0 0.0
    %934 = vmatpush2.msra.mxu0 0.0
    %935 = vmatprep.subr.mxu0 0.0
    %936 = vmatpush2.msra.mxu0 0.0
    %937 = vmatprep.subr.mxu0 0.0
    %938 = vmatpush2.msra.mxu0 0.0
    %939 = vmatprep.subr.mxu0 0.0
    %940 = vmatpush2.msra.mxu0 0.0
    %941 = vmatprep.subr.mxu0 0.0
    %942 = vmatpush2.msra.mxu0 0.0
    %943 = vmatprep.subr.mxu0 0.0
    %944 = vmatpush2.msra.mxu0 0.0
    %945 = vmatprep.subr.mxu0 0.0
    %946 = vmatpush2.msra.mxu0 0.0
    %947 = vmatprep.subr.mxu0 0.0
    %948 = vmatpush2.msra.mxu0 0.0
    %949 = vmatprep.subr.mxu0 0.0
    %950 = vmatpush2.msra.mxu0 0.0
    %951 = vmatprep.subr.mxu0 0.0
    %952 = vmatpush2.msra.mxu0 0.0
    %953 = vmatprep.subr.mxu0 0.0
    %954 = vmatpush2.msra.mxu0 0.0
    %955 = vmatprep.subr.mxu0 0.0
    %956 = vmatpush2.msra.mxu0 0.0
    %957 = vmatprep.mubr.f32.mxu0 0.0
    %958 = vmatmul.mubr.f32.gmra.mxu0 %v888
    %v959 = vpop.f32.mrf.mxu0
    %v960 = vadd.f32 %v874, %v959
    %v961 = vpop.f32.mrf.mxu0
    %962 = vmatprep.mubr.f32.mxu0 0.0
    %963 = vmatmul.mubr.f32.gmra.mxu0 %v891
    %v964 = vpop.f32.mrf.mxu0
    %v965 = vadd.f32 %v879, %v964
    %v966 = vpop.f32.mrf.mxu0
    %967 = vdwg.mxu0
    %v968 = vtanh.pop %v965
    %v969 = vxor.u32 %v960, 2147483648
    %v970 = vmul.f32 %v969, 1.442695
    %v971 = vpow.pop %v970
    %v972 = vadd.f32 %v971, 1.0
    %v973 = vrcp.pop %v972
    %v974 = vmul.f32 1.0, %v973
    %v975 = vmul.f32 %v968, %v974
    %s976 = scalar_lea.vmem %s3, 64
    %v977 = vld [vmem:[%s976] sm:$0xff]
    %v978 = vld [vmem:[%s976 + $0x8] sm:$0xff]
    %v980 = vsel %vm147, %v977, 0
    %v983 = vsel %vm147, %v978, 0
    %985 = vmatprep.subr.mxu0 0.0
    %986 = vmatpush1.msra.mxu0 0.0
    %987 = vmatprep.subr.mxu0 0.0
    %988 = vmatpush1.msra.mxu0 0.0
    %989 = vmatprep.subr.mxu0 0.0
    %990 = vmatpush1.msra.mxu0 0.0
    %991 = vmatprep.subr.mxu0 0.0
    %992 = vmatpush1.msra.mxu0 0.0
    %993 = vmatprep.subr.mxu0 0.0
    %994 = vmatpush1.msra.mxu0 0.0
    %995 = vmatprep.subr.mxu0 0.0
    %996 = vmatpush1.msra.mxu0 0.0
    %997 = vmatprep.subr.mxu0 0.0
    %998 = vmatpush1.msra.mxu0 0.0
    %999 = vmatprep.subr.mxu0 0.0
    %1000 = vmatpush1.msra.mxu0 0.0
    %1001 = vmatprep.subr.mxu0 0.0
    %1002 = vmatpush1.msra.mxu0 0.0
    %1003 = vmatprep.subr.mxu0 0.0
    %1004 = vmatpush1.msra.mxu0 0.0
    %1005 = vmatprep.subr.mxu0 0.0
    %1006 = vmatpush1.msra.mxu0 0.0
    %1007 = vmatprep.subr.mxu0 0.0
    %1008 = vmatpush1.msra.mxu0 0.0
    %1009 = vmatprep.subr.mxu0 0.0
    %1010 = vmatpush1.msra.mxu0 0.0
    %1011 = vmatprep.subr.mxu0 0.0
    %1012 = vmatpush1.msra.mxu0 0.0
    %1013 = vmatprep.subr.mxu0 0.0
    %1014 = vmatpush1.msra.mxu0 0.0
    %1015 = vmatprep.subr.mxu0 0.0
    %1016 = vmatpush1.msra.mxu0 %v975
    %1017 = vmatprep.subr.mxu0 0.0
    %1018 = vmatpush2.msra.mxu0 0.0
    %1019 = vmatprep.subr.mxu0 0.0
    %1020 = vmatpush2.msra.mxu0 0.0
    %1021 = vmatprep.subr.mxu0 0.0
    %1022 = vmatpush2.msra.mxu0 0.0
    %1023 = vmatprep.subr.mxu0 0.0
    %1024 = vmatpush2.msra.mxu0 0.0
    %1025 = vmatprep.subr.mxu0 0.0
    %1026 = vmatpush2.msra.mxu0 0.0
    %1027 = vmatprep.subr.mxu0 0.0
    %1028 = vmatpush2.msra.mxu0 0.0
    %1029 = vmatprep.subr.mxu0 0.0
    %1030 = vmatpush2.msra.mxu0 0.0
    %1031 = vmatprep.subr.mxu0 0.0
    %1032 = vmatpush2.msra.mxu0 0.0
    %1033 = vmatprep.subr.mxu0 0.0
    %1034 = vmatpush2.msra.mxu0 0.0
    %1035 = vmatprep.subr.mxu0 0.0
    %1036 = vmatpush2.msra.mxu0 0.0
    %1037 = vmatprep.subr.mxu0 0.0
    %1038 = vmatpush2.msra.mxu0 0.0
    %1039 = vmatprep.subr.mxu0 0.0
    %1040 = vmatpush2.msra.mxu0 0.0
    %1041 = vmatprep.subr.mxu0 0.0
    %1042 = vmatpush2.msra.mxu0 0.0
    %1043 = vmatprep.subr.mxu0 0.0
    %1044 = vmatpush2.msra.mxu0 0.0
    %1045 = vmatprep.subr.mxu0 0.0
    %1046 = vmatpush2.msra.mxu0 0.0
    %1047 = vmatprep.subr.mxu0 0.0
    %1048 = vmatpush2.msra.mxu0 0.0
    %1049 = vmatprep.mubr.f32.mxu0 0.0
    %1050 = vmatmul.mubr.f32.gmra.mxu0 %v980
    %v1051 = vpop.f32.mrf.mxu0
    %v1052 = vadd.f32 0.0, %v1051
    %v1053 = vpop.f32.mrf.mxu0
    %1054 = vmatprep.mubr.f32.mxu0 0.0
    %1055 = vmatmul.mubr.f32.gmra.mxu0 %v983
    %v1056 = vpop.f32.mrf.mxu0
    %v1057 = vadd.f32 0.0, %v1056
    %v1058 = vpop.f32.mrf.mxu0
    %1059 = vdwg.mxu0
    %v1060 = vadd.f32 %v852, %v1057
    %s1061 = scalar_lea.vmem %s4, 32
    %v1062 = vld [vmem:[%s1061] sm:$0xff]
    %1064 = vset.pattern.permute.xlu0 0
    %1065 = vperm.xlu0 %1064, %v1062
    %v1066 = vpop.permute.xlu0 %1065
    %v1068 = vadd.f32 %v1052, %v1066
    %v1069 = vadd.f32 %v1068, %v861
    %1071 = vrot.lane.b32.xlu0 %v1069, 124
    %v1072 = vpop.permute.xlu0 %1071
    %s1073 = scalar_lea.vmem %s1, 80
    %v1074 = vld [vmem:[%s1073] sm:$0xff]
    %v1075 = vld [vmem:[%s1073 + $0x8] sm:$0xff]
    %s1076 = scalar_lea.vmem %s2, 80
    %v1077 = vld [vmem:[%s1076] sm:$0xff]
    %v1078 = vld [vmem:[%s1076 + $0x8] sm:$0xff]
    %1080 = vset.pattern.permute.xlu0 0
    %1081 = vperm.xlu0 %1080, %v1077
    %v1082 = vpop.permute.xlu0 %1081
    %1085 = vset.pattern.permute.xlu0 0
    %1086 = vperm.xlu0 %1085, %v1078
    %v1087 = vpop.permute.xlu0 %1086
    %1089 = vrot.lane.b32.xlu0 %v1069, 4
    %v1090 = vpop.permute.xlu0 %1089
    %1091 = vrot.lane.b32.xlu0 %v1072, 4
    %v1092 = vpop.permute.xlu0 %1091
    %v1096 = vsel %vm55, %v1074, 0
    %v1099 = vsel %vm55, %v1075, 0
    %1101 = vmatprep.subr.mxu0 0.0
    %1102 = vmatpush1.msra.mxu0 0.0
    %1103 = vmatprep.subr.mxu0 0.0
    %1104 = vmatpush1.msra.mxu0 0.0
    %1105 = vmatprep.subr.mxu0 0.0
    %1106 = vmatpush1.msra.mxu0 0.0
    %1107 = vmatprep.subr.mxu0 0.0
    %1108 = vmatpush1.msra.mxu0 0.0
    %1109 = vmatprep.subr.mxu0 0.0
    %1110 = vmatpush1.msra.mxu0 0.0
    %1111 = vmatprep.subr.mxu0 0.0
    %1112 = vmatpush1.msra.mxu0 0.0
    %1113 = vmatprep.subr.mxu0 0.0
    %1114 = vmatpush1.msra.mxu0 0.0
    %1115 = vmatprep.subr.mxu0 0.0
    %1116 = vmatpush1.msra.mxu0 0.0
    %1117 = vmatprep.subr.mxu0 0.0
    %1118 = vmatpush1.msra.mxu0 0.0
    %1119 = vmatprep.subr.mxu0 0.0
    %1120 = vmatpush1.msra.mxu0 0.0
    %1121 = vmatprep.subr.mxu0 0.0
    %1122 = vmatpush1.msra.mxu0 0.0
    %1123 = vmatprep.subr.mxu0 0.0
    %1124 = vmatpush1.msra.mxu0 0.0
    %1125 = vmatprep.subr.mxu0 0.0
    %1126 = vmatpush1.msra.mxu0 0.0
    %1127 = vmatprep.subr.mxu0 0.0
    %1128 = vmatpush1.msra.mxu0 0.0
    %1129 = vmatprep.subr.mxu0 0.0
    %1130 = vmatpush1.msra.mxu0 %v1092
    %1131 = vmatprep.subr.mxu0 0.0
    %1132 = vmatpush1.msra.mxu0 %v1090
    %1133 = vmatprep.subr.mxu0 0.0
    %1134 = vmatpush2.msra.mxu0 0.0
    %1135 = vmatprep.subr.mxu0 0.0
    %1136 = vmatpush2.msra.mxu0 0.0
    %1137 = vmatprep.subr.mxu0 0.0
    %1138 = vmatpush2.msra.mxu0 0.0
    %1139 = vmatprep.subr.mxu0 0.0
    %1140 = vmatpush2.msra.mxu0 0.0
    %1141 = vmatprep.subr.mxu0 0.0
    %1142 = vmatpush2.msra.mxu0 0.0
    %1143 = vmatprep.subr.mxu0 0.0
    %1144 = vmatpush2.msra.mxu0 0.0
    %1145 = vmatprep.subr.mxu0 0.0
    %1146 = vmatpush2.msra.mxu0 0.0
    %1147 = vmatprep.subr.mxu0 0.0
    %1148 = vmatpush2.msra.mxu0 0.0
    %1149 = vmatprep.subr.mxu0 0.0
    %1150 = vmatpush2.msra.mxu0 0.0
    %1151 = vmatprep.subr.mxu0 0.0
    %1152 = vmatpush2.msra.mxu0 0.0
    %1153 = vmatprep.subr.mxu0 0.0
    %1154 = vmatpush2.msra.mxu0 0.0
    %1155 = vmatprep.subr.mxu0 0.0
    %1156 = vmatpush2.msra.mxu0 0.0
    %1157 = vmatprep.subr.mxu0 0.0
    %1158 = vmatpush2.msra.mxu0 0.0
    %1159 = vmatprep.subr.mxu0 0.0
    %1160 = vmatpush2.msra.mxu0 0.0
    %1161 = vmatprep.subr.mxu0 0.0
    %1162 = vmatpush2.msra.mxu0 0.0
    %1163 = vmatprep.subr.mxu0 0.0
    %1164 = vmatpush2.msra.mxu0 0.0
    %1165 = vmatprep.mubr.f32.mxu0 0.0
    %1166 = vmatmul.mubr.f32.gmra.mxu0 %v1096
    %v1167 = vpop.f32.mrf.mxu0
    %v1168 = vadd.f32 %v1082, %v1167
    %v1169 = vpop.f32.mrf.mxu0
    %1170 = vmatprep.mubr.f32.mxu0 0.0
    %1171 = vmatmul.mubr.f32.gmra.mxu0 %v1099
    %v1172 = vpop.f32.mrf.mxu0
    %v1173 = vadd.f32 %v1087, %v1172
    %v1174 = vpop.f32.mrf.mxu0
    %1175 = vdwg.mxu0
    %v1176 = vtanh.pop %v1173
    %v1177 = vxor.u32 %v1168, 2147483648
    %v1178 = vmul.f32 %v1177, 1.442695
    %v1179 = vpow.pop %v1178
    %v1180 = vadd.f32 %v1179, 1.0
    %v1181 = vrcp.pop %v1180
    %v1182 = vmul.f32 1.0, %v1181
    %v1183 = vmul.f32 %v1176, %v1182
    %s1184 = scalar_lea.vmem %s3, 80
    %v1185 = vld [vmem:[%s1184] sm:$0xff]
    %v1186 = vld [vmem:[%s1184 + $0x8] sm:$0xff]
    %v1188 = vsel %vm147, %v1185, 0
    %v1191 = vsel %vm147, %v1186, 0
    %1193 = vmatprep.subr.mxu0 0.0
    %1194 = vmatpush1.msra.mxu0 0.0
    %1195 = vmatprep.subr.mxu0 0.0
    %1196 = vmatpush1.msra.mxu0 0.0
    %1197 = vmatprep.subr.mxu0 0.0
    %1198 = vmatpush1.msra.mxu0 0.0
    %1199 = vmatprep.subr.mxu0 0.0
    %1200 = vmatpush1.msra.mxu0 0.0
    %1201 = vmatprep.subr.mxu0 0.0
    %1202 = vmatpush1.msra.mxu0 0.0
    %1203 = vmatprep.subr.mxu0 0.0
    %1204 = vmatpush1.msra.mxu0 0.0
    %1205 = vmatprep.subr.mxu0 0.0
    %1206 = vmatpush1.msra.mxu0 0.0
    %1207 = vmatprep.subr.mxu0 0.0
    %1208 = vmatpush1.msra.mxu0 0.0
    %1209 = vmatprep.subr.mxu0 0.0
    %1210 = vmatpush1.msra.mxu0 0.0
    %1211 = vmatprep.subr.mxu0 0.0
    %1212 = vmatpush1.msra.mxu0 0.0
    %1213 = vmatprep.subr.mxu0 0.0
    %1214 = vmatpush1.msra.mxu0 0.0
    %1215 = vmatprep.subr.mxu0 0.0
    %1216 = vmatpush1.msra.mxu0 0.0
    %1217 = vmatprep.subr.mxu0 0.0
    %1218 = vmatpush1.msra.mxu0 0.0
    %1219 = vmatprep.subr.mxu0 0.0
    %1220 = vmatpush1.msra.mxu0 0.0
    %1221 = vmatprep.subr.mxu0 0.0
    %1222 = vmatpush1.msra.mxu0 0.0
    %1223 = vmatprep.subr.mxu0 0.0
    %1224 = vmatpush1.msra.mxu0 %v1183
    %1225 = vmatprep.subr.mxu0 0.0
    %1226 = vmatpush2.msra.mxu0 0.0
    %1227 = vmatprep.subr.mxu0 0.0
    %1228 = vmatpush2.msra.mxu0 0.0
    %1229 = vmatprep.subr.mxu0 0.0
    %1230 = vmatpush2.msra.mxu0 0.0
    %1231 = vmatprep.subr.mxu0 0.0
    %1232 = vmatpush2.msra.mxu0 0.0
    %1233 = vmatprep.subr.mxu0 0.0
    %1234 = vmatpush2.msra.mxu0 0.0
    %1235 = vmatprep.subr.mxu0 0.0
    %1236 = vmatpush2.msra.mxu0 0.0
    %1237 = vmatprep.subr.mxu0 0.0
    %1238 = vmatpush2.msra.mxu0 0.0
    %1239 = vmatprep.subr.mxu0 0.0
    %1240 = vmatpush2.msra.mxu0 0.0
    %1241 = vmatprep.subr.mxu0 0.0
    %1242 = vmatpush2.msra.mxu0 0.0
    %1243 = vmatprep.subr.mxu0 0.0
    %1244 = vmatpush2.msra.mxu0 0.0
    %1245 = vmatprep.subr.mxu0 0.0
    %1246 = vmatpush2.msra.mxu0 0.0
    %1247 = vmatprep.subr.mxu0 0.0
    %1248 = vmatpush2.msra.mxu0 0.0
    %1249 = vmatprep.subr.mxu0 0.0
    %1250 = vmatpush2.msra.mxu0 0.0
    %1251 = vmatprep.subr.mxu0 0.0
    %1252 = vmatpush2.msra.mxu0 0.0
    %1253 = vmatprep.subr.mxu0 0.0
    %1254 = vmatpush2.msra.mxu0 0.0
    %1255 = vmatprep.subr.mxu0 0.0
    %1256 = vmatpush2.msra.mxu0 0.0
    %1257 = vmatprep.mubr.f32.mxu0 0.0
    %1258 = vmatmul.mubr.f32.gmra.mxu0 %v1188
    %v1259 = vpop.f32.mrf.mxu0
    %v1260 = vpop.f32.mrf.mxu0
    %1261 = vmatprep.mubr.f32.mxu0 0.0
    %1262 = vmatmul.mubr.f32.gmra.mxu0 %v1191
    %v1263 = vpop.f32.mrf.mxu0
    %v1264 = vadd.f32 0.0, %v1263
    %v1265 = vpop.f32.mrf.mxu0
    %1266 = vdwg.mxu0
    %v1267 = vadd.f32 %v1060, %v1264
    %v1268 = vld [vmem:[#allocation2] sm:$0x1]
    %1270 = vset.pattern.permute.xlu0 0
    %1271 = vperm.xlu0 %1270, %v1268
    %v1272 = vpop.permute.xlu0 %1271
    %v1274 = vlaneseq
    %v1275 = vshrl.u32 %v1274, 7
    %v1276 = vsub.s32 0, %v1275
    %v1277 = vrot.slane %v1272, %v1276
    %v1278 = vadd.f32 %v1267, %v1277
    %1279 = vst [vmem:[#allocation3] sm:$0x1] %v1278
    // Predicated region
    $region26: #{tpu_custom_call.1} parent=1 // pred_check
      _
    $region27: #{tpu_custom_call.1} parent=1 // pred_check_branch
      %1281 = sbr.rel (0) target = $region29
    $region28: #{tpu_custom_call.1} parent=1 // pred_region
      %s1283 = ssub.s32 16, 16
      %1284 = vsyncadd [#allocation4], %s1283
      %s1286 = sshll.u32 [#allocation3], 4
      %s1287 = int_to_ptr.vmem [resolvable:$true] %s1286
      %1289 = dma.vmem_to_hbm [thread:$0]  %s1287, 16, %s6, [#allocation4]
    $region29: #{tpu_custom_call.1} parent=1 // pred_fallthru
      _
    // Predicated region
    $region30: #{tpu_custom_call.1} parent=1 // pred_check
      _
    $region31: #{tpu_custom_call.1} parent=1 // pred_check_branch
      %1291 = sbr.rel (0) target = $region33
    $region32: #{tpu_custom_call.1} parent=1 // pred_region
      %1292 = dma.done [#allocation4], 16
    $region33: #{tpu_custom_call.1} parent=1 // pred_fallthru
      _
    %1293 = vsyncpa [#allocation4], 1

</llo_original>
